<compile_context>
chip_gen: v7x
topology: tpu7x:2x2x1
jax: 0.10.0
libtpu: 0.0.40
codegen_flags: <defaults>
</compile_context>

<pallas_src>
import functools

import jax
import jax.numpy as jnp
from jax.experimental import pallas as pl
from jax.experimental.pallas import tpu as pltpu

_LANES = 128
_MASKED_SCORE = -1e30  # finite "-inf": avoids inf-inf NaNs in the online-max updates


def _astp_kernel(x_ref, w1_ref, b1_ref, w2_ref, b2_ref, o_ref,
                 m_sc, l_sc, am_sc, as_sc,
                 *, t_tile, t_total, needs_mask):
    ti = pl.program_id(1)

    @pl.when(ti == 0)
    def _init():
        m_sc[...] = jnp.full_like(m_sc, _MASKED_SCORE)
        l_sc[...] = jnp.zeros_like(l_sc)
        am_sc[...] = jnp.zeros_like(am_sc)
        as_sc[...] = jnp.zeros_like(as_sc)

    x_blk = x_ref[...]                               # (D, TT), native HBM dtype
    x_bf = x_blk.astype(jnp.bfloat16)                # MXU operand
    x_f32 = x_blk.astype(jnp.float32)                # statistics operand

    # 1x1 convs == channel matmuls on the MXU: bf16 in, f32 accumulate.
    h = jnp.tanh(jnp.dot(w1_ref[...], x_bf,
                         preferred_element_type=jnp.float32) + b1_ref[...])   # (BN, TT)
    s = jnp.dot(w2_ref[...], h.astype(jnp.bfloat16),
                preferred_element_type=jnp.float32) + b2_ref[...]             # (D, TT)

    # Lane-dense online softmax: accumulators are (D, 128) = one slot per lane column.
    # Per-block work is pure elementwise max/add over aligned 128-wide chunks; the only
    # cross-lane (XLU) reduction happens once, in the finalize branch below.
    n_chunks = t_tile // _LANES
    lane = jax.lax.broadcasted_iota(jnp.int32, (1, _LANES), 1)

    m_prev = m_sc[...]
    m_new = m_prev
    s_chunks = []
    x_chunks = []
    for c in range(n_chunks):
        sc = s[:, c * _LANES:(c + 1) * _LANES]       # (D, 128), lane-tile aligned slice
        xc = x_f32[:, c * _LANES:(c + 1) * _LANES]
        if needs_mask:
            # Columns past the true sequence length (wrapper padding or OOB block tail):
            # -1e30 keeps them out of the max; x -> 0 keeps p*x / p*x^2 exactly zero.
            valid = (ti * t_tile + c * _LANES + lane) < t_total
            sc = jnp.where(valid, sc, _MASKED_SCORE)
            xc = jnp.where(valid, xc, 0.0)
        s_chunks.append(sc)
        x_chunks.append(xc)
        m_new = jnp.maximum(m_new, sc)

    scale = jnp.exp(m_prev - m_new)                  # (D, 128); 0 against zeroed accs at ti==0
    l_acc = scale * l_sc[...]
    am_acc = scale * am_sc[...]
    as_acc = scale * as_sc[...]
    for sc, xc in zip(s_chunks, x_chunks):
        p = jnp.exp(sc - m_new)
        px = p * xc
        l_acc = l_acc + p
        am_acc = am_acc + px
        as_acc = as_acc + px * xc
    m_sc[...] = m_new
    l_sc[...] = l_acc
    am_sc[...] = am_acc
    as_sc[...] = as_acc

    @pl.when(ti == pl.num_programs(1) - 1)
    def _finalize():
        d = o_ref.shape[0] // 2
        m = m_sc[...]                                             # (D, 128)
        g_max = jnp.max(m, axis=-1, keepdims=True)                # (D, 1)   XLU, once
        w = jnp.exp(m - g_max)                                    # fully-masked lanes -> 0
        l = jnp.sum(l_sc[...] * w, axis=-1, keepdims=True)        # (D, 1)
        am = jnp.sum(am_sc[...] * w, axis=-1, keepdims=True)
        asq = jnp.sum(as_sc[...] * w, axis=-1, keepdims=True)
        inv_l = pl.reciprocal(l, approx=True)                     # EUP slot
        mean = am * inv_l
        var = asq * inv_l - mean * mean
        std = jnp.sqrt(jnp.maximum(var, 1e-7))
        # Output is 2*D floats per batch (written once) — negligible traffic either layout.
        o_ref[0:d, :] = mean.astype(o_ref.dtype)
        o_ref[d:2 * d, :] = std.astype(o_ref.dtype)


def _vmem_step_budget_bytes():
    """Per-grid-step working-set budget; tighter on v7x-class chips (64 MiB VMEM)."""
    vmem_bytes = 128 * 1024 * 1024
    try:
        vmem_bytes = int(pltpu.get_tpu_info().vmem_capacity_bytes)
    except Exception:
        pass  # interpret mode / older jax: assume v5e/v6e sizing
    if vmem_bytes <= 64 * 1024 * 1024:
        return 8 * 1024 * 1024       # v7x-class
    return 16 * 1024 * 1024          # v5e / v6e


def _pick_t_tile(d, bn, t, x_itemsize, budget):
    """Largest 128-multiple tile that fits the VMEM budget and minimizes padded work."""
    best = _LANES
    best_padded = pl.cdiv(t, _LANES) * _LANES
    for cand in (1024, 512, 256, 128):
        if cand > t:                 # never let a block exceed the array's time extent
            continue
        # double-buffered x input block + live f32/bf16 temporaries (x_f32, x_bf, h, h_bf, s)
        per_step = cand * (2 * d * x_itemsize + 10 * d + 6 * bn)
        if per_step > budget:
            continue
        padded = pl.cdiv(t, cand) * cand
        if padded < best_padded or (padded == best_padded and cand > best):
            best, best_padded = cand, padded
    return best


def astp_forward(x, w1, b1, w2, b2):
    """x: (B, C, F, T) or (B, D, T); w1: (BN, D); b1: (BN,); w2: (D, BN); b2: (D,).

    Returns (B, 2*D) = concat([mean, std], axis=1).
    """
    if x.ndim == 4:
        bsz, c, f, t = x.shape
        x = x.reshape(bsz, c * f, t)
    bsz, d, t = x.shape
    bn = w1.shape[0]
    assert w1.shape == (bn, d) and w2.shape == (d, bn)
    assert b1.shape == (bn,) and b2.shape == (d,)
    t_orig = t

    # Very short sequences: pad the time axis to one full lane tile so every block is
    # 128-lane dense; padded columns are masked in-kernel. Longer non-divisible T is
    # handled by a cdiv grid + in-kernel masking (no extra HBM pass for padding).
    if t < _LANES:
        x = jnp.pad(x, ((0, 0), (0, 0), (0, _LANES - t)))
        t = _LANES

    itemsize = jnp.dtype(x.dtype).itemsize
    budget = _vmem_step_budget_bytes()
    t_tile = _pick_t_tile(d, bn, t, itemsize, budget)
    num_t = pl.cdiv(t, t_tile)
    needs_mask = (t_orig % t_tile) != 0

    w1_bf = w1.astype(jnp.bfloat16)
    w2_bf = w2.astype(jnp.bfloat16)
    b1_2d = b1.reshape(bn, 1).astype(jnp.float32)
    b2_2d = b2.reshape(d, 1).astype(jnp.float32)

    kernel = functools.partial(_astp_kernel, t_tile=t_tile, t_total=t_orig,
                               needs_mask=needs_mask)

    flops = bsz * t * (4 * bn * d + 12 * d)
    transcendentals = bsz * t * (bn + d)
    bytes_accessed = (x.size * itemsize
                      + (w1.size + w2.size) * 2 + (b1.size + b2.size) * 4
                      + bsz * 2 * d * 4)

    out = pl.pallas_call(
        kernel,
        out_shape=jax.ShapeDtypeStruct((bsz, 2 * d, 1), jnp.float32),
        grid_spec=pltpu.PrefetchScalarGridSpec(
            num_scalar_prefetch=0,
            grid=(bsz, num_t),
            in_specs=[
                pl.BlockSpec((None, d, t_tile), lambda b, ti: (b, 0, ti)),  # x time-tile
                pl.BlockSpec((bn, d), lambda b, ti: (0, 0)),                # W1 (resident, bf16)
                pl.BlockSpec((bn, 1), lambda b, ti: (0, 0)),                # b1
                pl.BlockSpec((d, bn), lambda b, ti: (0, 0)),                # W2 (resident, bf16)
                pl.BlockSpec((d, 1), lambda b, ti: (0, 0)),                 # b2
            ],
            out_specs=pl.BlockSpec((None, 2 * d, 1), lambda b, ti: (b, 0, 0)),
            scratch_shapes=[pltpu.VMEM((d, _LANES), jnp.float32)] * 4,      # m, l, sum(px), sum(pxx)
        ),
        compiler_params=pltpu.CompilerParams(
            dimension_semantics=("parallel", "arbitrary"),
            vmem_limit_bytes=4 * budget,
        ),
        cost_estimate=pl.CostEstimate(
            flops=flops,
            transcendentals=transcendentals,
            bytes_accessed=bytes_accessed,
        ),
    )(x, w1_bf, b1_2d, w2_bf, b2_2d)
    return out.reshape(bsz, 2 * d)


if __name__ == "__main__":
    # Small shapes consistent with the module's 4-D (ResNet-style) input path:
    # x: (B, C, F, T) with in_dim = C * F, bottleneck_dim = 128 (module default).
    B, C, F, T = 2, 4, 16, 16
    D = C * F          # in_dim = 64
    BN = 128           # bottleneck_dim

    key = jax.random.PRNGKey(0)
    kx, k1, k2, k3, k4 = jax.random.split(key, 5)
    x = jax.random.normal(kx, (B, C, F, T), dtype=jnp.float32)
    w1 = 0.1 * jax.random.normal(k1, (BN, D), dtype=jnp.float32)
    b1 = 0.1 * jax.random.normal(k2, (BN,), dtype=jnp.float32)
    w2 = 0.1 * jax.random.normal(k3, (D, BN), dtype=jnp.float32)
    b2 = 0.1 * jax.random.normal(k4, (D,), dtype=jnp.float32)

    out = jax.block_until_ready(jax.jit(astp_forward)(x, w1, b1, w2, b2))

    # Pure-JAX reference mirroring the PyTorch forward (global_context_att=False).
    xr = x.reshape(B, D, T)
    h = jnp.tanh(jnp.einsum("od,bdt->bot", w1, xr, precision="highest")
                 + b1[None, :, None])
    s = jnp.einsum("do,bot->bdt", w2, h, precision="highest") + b2[None, :, None]
    alpha = jax.nn.softmax(s, axis=2)
    mean = jnp.sum(alpha * xr, axis=2)
    var = jnp.sum(alpha * xr * xr, axis=2) - mean ** 2
    std = jnp.sqrt(jnp.maximum(var, 1e-7))
    ref = jnp.concatenate([mean, std], axis=1)

    assert out.shape == (B, 2 * D), out.shape
    max_err = float(jnp.max(jnp.abs(out - ref)))
    assert jnp.allclose(out, ref, atol=1e-2, rtol=1e-2), f"mismatch vs reference: {max_err}"
    print("KERNEL_OK")
</pallas_src>

<mosaic_0001>
module attributes {stable_mosaic.version = 11 : i64} {
  func.func @_astp_kernel(%arg0: i32, %arg1: i32, %arg2: memref<1x64x128xf32, #tpu.memory_space<vmem>>, %arg3: memref<128x64xbf16, #tpu.memory_space<vmem>>, %arg4: memref<128x1xf32, #tpu.memory_space<vmem>>, %arg5: memref<64x128xbf16, #tpu.memory_space<vmem>>, %arg6: memref<64x1xf32, #tpu.memory_space<vmem>>, %arg7: memref<1x128x1xf32, #tpu.memory_space<vmem>>, %arg8: memref<64x128xf32, #tpu.memory_space<vmem>>, %arg9: memref<64x128xf32, #tpu.memory_space<vmem>>, %arg10: memref<64x128xf32, #tpu.memory_space<vmem>>, %arg11: memref<64x128xf32, #tpu.memory_space<vmem>>) attributes {dimension_semantics = [#tpu.dimension_semantics<parallel>, #tpu.dimension_semantics<arbitrary>], iteration_bounds = array<i64: 2, 1>, scalar_prefetch = 0 : i64, scratch_operands = 4 : i64, tpu.core_type = #tpu.core_type<tc>, window_params = [{transform_indices = @transform_0, window_bounds = array<i64: 1, 64, 128>}, {pipeline_mode = #tpu.pipeline_mode<synchronous>, transform_indices = @transform_1, window_bounds = array<i64: 128, 64>}, {pipeline_mode = #tpu.pipeline_mode<synchronous>, transform_indices = @transform_2, window_bounds = array<i64: 128, 1>}, {pipeline_mode = #tpu.pipeline_mode<synchronous>, transform_indices = @transform_3, window_bounds = array<i64: 64, 128>}, {pipeline_mode = #tpu.pipeline_mode<synchronous>, transform_indices = @transform_4, window_bounds = array<i64: 64, 1>}, {transform_indices = @transform_5, window_bounds = array<i64: 1, 128, 1>}]} {
    %c0_i32 = arith.constant 0 : i32
    %0 = arith.cmpi eq, %arg1, %c0_i32 : i32
    %1 = arith.extui %0 : i1 to i32
    %c0_i32_0 = arith.constant 0 : i32
    %2 = arith.cmpi ne, %1, %c0_i32_0 : i32
    scf.if %2 {
      %cst_33 = arith.constant -1.000000e+30 : f32
      %57 = vector.broadcast %cst_33 : f32 to vector<64x128xf32>
      %c0_34 = arith.constant 0 : index
      %c0_35 = arith.constant 0 : index
      %58 = vector.load %arg8[%c0_34, %c0_35] : memref<64x128xf32, #tpu.memory_space<vmem>>, vector<64x128xf32>
      tpu.vector_store %arg8[%c0_34, %c0_35], %57 {strides = array<i32>} : memref<64x128xf32, #tpu.memory_space<vmem>>, vector<64x128xf32>,
      %cst_36 = arith.constant 0.000000e+00 : f32
      %59 = vector.broadcast %cst_36 : f32 to vector<64x128xf32>
      %c0_37 = arith.constant 0 : index
      %c0_38 = arith.constant 0 : index
      %60 = vector.load %arg9[%c0_37, %c0_38] : memref<64x128xf32, #tpu.memory_space<vmem>>, vector<64x128xf32>
      tpu.vector_store %arg9[%c0_37, %c0_38], %59 {strides = array<i32>} : memref<64x128xf32, #tpu.memory_space<vmem>>, vector<64x128xf32>,
      %cst_39 = arith.constant 0.000000e+00 : f32
      %61 = vector.broadcast %cst_39 : f32 to vector<64x128xf32>
      %c0_40 = arith.constant 0 : index
      %c0_41 = arith.constant 0 : index
      %62 = vector.load %arg10[%c0_40, %c0_41] : memref<64x128xf32, #tpu.memory_space<vmem>>, vector<64x128xf32>
      tpu.vector_store %arg10[%c0_40, %c0_41], %61 {strides = array<i32>} : memref<64x128xf32, #tpu.memory_space<vmem>>, vector<64x128xf32>,
      %cst_42 = arith.constant 0.000000e+00 : f32
      %63 = vector.broadcast %cst_42 : f32 to vector<64x128xf32>
      %c0_43 = arith.constant 0 : index
      %c0_44 = arith.constant 0 : index
      %64 = vector.load %arg11[%c0_43, %c0_44] : memref<64x128xf32, #tpu.memory_space<vmem>>, vector<64x128xf32>
      tpu.vector_store %arg11[%c0_43, %c0_44], %63 {strides = array<i32>} : memref<64x128xf32, #tpu.memory_space<vmem>>, vector<64x128xf32>,
    } else {
    }
    %c0 = arith.constant 0 : index
    %c0_1 = arith.constant 0 : index
    %c0_2 = arith.constant 0 : index
    %3 = vector.load %arg2[%c0, %c0_1, %c0_2] : memref<1x64x128xf32, #tpu.memory_space<vmem>>, vector<1x64x128xf32>
    %4 = vector.shape_cast %3 : vector<1x64x128xf32> to vector<64x128xf32>
    %5 = arith.truncf %4 : vector<64x128xf32> to vector<64x128xbf16>
    %c0_3 = arith.constant 0 : index
    %c0_4 = arith.constant 0 : index
    %6 = vector.load %arg3[%c0_3, %c0_4] : memref<128x64xbf16, #tpu.memory_space<vmem>>, vector<128x64xbf16>
    %cst = arith.constant dense<0.000000e+00> : vector<128x128xf32>
    %7 = tpu.matmul %6, %5, %cst {dimension_numbers = #tpu.dot_dimension_numbers<[1], [0], [0], [1], [0, 0, 1, 1], [], []>} : vector<128x64xbf16>, vector<64x128xbf16>, vector<128x128xf32> -> vector<128x128xf32>
    %c0_5 = arith.constant 0 : index
    %c0_6 = arith.constant 0 : index
    %8 = vector.load %arg4[%c0_5, %c0_6] : memref<128x1xf32, #tpu.memory_space<vmem>>, vector<128x1xf32>
    %9 = vector.broadcast %8 : vector<128x1xf32> to vector<128x128xf32>
    %10 = arith.addf %7, %9 : vector<128x128xf32>
    %11 = math.tanh %10 : vector<128x128xf32>
    %c0_7 = arith.constant 0 : index
    %c0_8 = arith.constant 0 : index
    %12 = vector.load %arg5[%c0_7, %c0_8] : memref<64x128xbf16, #tpu.memory_space<vmem>>, vector<64x128xbf16>
    %13 = arith.truncf %11 : vector<128x128xf32> to vector<128x128xbf16>
    %cst_9 = arith.constant dense<0.000000e+00> : vector<64x128xf32>
    %14 = tpu.matmul %12, %13, %cst_9 {dimension_numbers = #tpu.dot_dimension_numbers<[1], [0], [0], [1], [0, 0, 1, 1], [], []>} : vector<64x128xbf16>, vector<128x128xbf16>, vector<64x128xf32> -> vector<64x128xf32>
    %c0_10 = arith.constant 0 : index
    %c0_11 = arith.constant 0 : index
    %15 = vector.load %arg6[%c0_10, %c0_11] : memref<64x1xf32, #tpu.memory_space<vmem>>, vector<64x1xf32>
    %16 = vector.broadcast %15 : vector<64x1xf32> to vector<64x128xf32>
    %17 = arith.addf %14, %16 : vector<64x128xf32>
    %18 = tpu.iota {dimensions = array<i32: 1>} : vector<1x128xi32>
    %c0_12 = arith.constant 0 : index
    %c0_13 = arith.constant 0 : index
    %19 = vector.load %arg8[%c0_12, %c0_13] : memref<64x128xf32, #tpu.memory_space<vmem>>, vector<64x128xf32>
    %c128_i32 = arith.constant 128 : i32
    %20 = arith.muli %arg1, %c128_i32 : i32
    %c0_i32_14 = arith.constant 0 : i32
    %21 = arith.addi %20, %c0_i32_14 : i32
    %22 = vector.broadcast %21 : i32 to vector<1x128xi32>
    %23 = arith.addi %22, %18 : vector<1x128xi32>
    %c16_i32 = arith.constant 16 : i32
    %24 = vector.broadcast %c16_i32 : i32 to vector<1x128xi32>
    %25 = arith.cmpi slt, %23, %24 : vector<1x128xi32>
    %cst_15 = arith.constant -1.000000e+30 : f32
    %26 = vector.shape_cast %25 : vector<1x128xi1> to vector<1x128xi1>
    %27 = vector.broadcast %26 : vector<1x128xi1> to vector<64x128xi1>
    %28 = vector.broadcast %cst_15 : f32 to vector<64x128xf32>
    %29 = arith.select %27, %17, %28 : vector<64x128xi1>, vector<64x128xf32>
    %cst_16 = arith.constant 0.000000e+00 : f32
    %30 = vector.shape_cast %25 : vector<1x128xi1> to vector<1x128xi1>
    %31 = vector.broadcast %30 : vector<1x128xi1> to vector<64x128xi1>
    %32 = vector.broadcast %cst_16 : f32 to vector<64x128xf32>
    %33 = arith.select %31, %4, %32 : vector<64x128xi1>, vector<64x128xf32>
    %34 = arith.maximumf %19, %29 : vector<64x128xf32>
    %35 = arith.subf %19, %34 : vector<64x128xf32>
    %36 = math.exp %35 : vector<64x128xf32>
    %c0_17 = arith.constant 0 : index
    %c0_18 = arith.constant 0 : index
    %37 = vector.load %arg9[%c0_17, %c0_18] : memref<64x128xf32, #tpu.memory_space<vmem>>, vector<64x128xf32>
    %38 = arith.mulf %36, %37 : vector<64x128xf32>
    %c0_19 = arith.constant 0 : index
    %c0_20 = arith.constant 0 : index
    %39 = vector.load %arg10[%c0_19, %c0_20] : memref<64x128xf32, #tpu.memory_space<vmem>>, vector<64x128xf32>
    %40 = arith.mulf %36, %39 : vector<64x128xf32>
    %c0_21 = arith.constant 0 : index
    %c0_22 = arith.constant 0 : index
    %41 = vector.load %arg11[%c0_21, %c0_22] : memref<64x128xf32, #tpu.memory_space<vmem>>, vector<64x128xf32>
    %42 = arith.mulf %36, %41 : vector<64x128xf32>
    %43 = arith.subf %29, %34 : vector<64x128xf32>
    %44 = math.exp %43 : vector<64x128xf32>
    %45 = arith.mulf %44, %33 : vector<64x128xf32>
    %46 = arith.addf %38, %44 : vector<64x128xf32>
    %47 = arith.addf %40, %45 : vector<64x128xf32>
    %48 = arith.mulf %45, %33 : vector<64x128xf32>
    %49 = arith.addf %42, %48 : vector<64x128xf32>
    %c0_23 = arith.constant 0 : index
    %c0_24 = arith.constant 0 : index
    %50 = vector.load %arg8[%c0_23, %c0_24] : memref<64x128xf32, #tpu.memory_space<vmem>>, vector<64x128xf32>
    tpu.vector_store %arg8[%c0_23, %c0_24], %34 {strides = array<i32>} : memref<64x128xf32, #tpu.memory_space<vmem>>, vector<64x128xf32>,
    %c0_25 = arith.constant 0 : index
    %c0_26 = arith.constant 0 : index
    %51 = vector.load %arg9[%c0_25, %c0_26] : memref<64x128xf32, #tpu.memory_space<vmem>>, vector<64x128xf32>
    tpu.vector_store %arg9[%c0_25, %c0_26], %46 {strides = array<i32>} : memref<64x128xf32, #tpu.memory_space<vmem>>, vector<64x128xf32>,
    %c0_27 = arith.constant 0 : index
    %c0_28 = arith.constant 0 : index
    %52 = vector.load %arg10[%c0_27, %c0_28] : memref<64x128xf32, #tpu.memory_space<vmem>>, vector<64x128xf32>
    tpu.vector_store %arg10[%c0_27, %c0_28], %47 {strides = array<i32>} : memref<64x128xf32, #tpu.memory_space<vmem>>, vector<64x128xf32>,
    %c0_29 = arith.constant 0 : index
    %c0_30 = arith.constant 0 : index
    %53 = vector.load %arg11[%c0_29, %c0_30] : memref<64x128xf32, #tpu.memory_space<vmem>>, vector<64x128xf32>
    tpu.vector_store %arg11[%c0_29, %c0_30], %49 {strides = array<i32>} : memref<64x128xf32, #tpu.memory_space<vmem>>, vector<64x128xf32>,
    %c0_i32_31 = arith.constant 0 : i32
    %54 = arith.cmpi eq, %arg1, %c0_i32_31 : i32
    %55 = arith.extui %54 : i1 to i32
    %c0_i32_32 = arith.constant 0 : i32
    %56 = arith.cmpi ne, %55, %c0_i32_32 : i32
    scf.if %56 {
      %c0_33 = arith.constant 0 : index
      %c0_34 = arith.constant 0 : index
      %57 = vector.load %arg8[%c0_33, %c0_34] : memref<64x128xf32, #tpu.memory_space<vmem>>, vector<64x128xf32>
      %cst_35 = arith.constant dense<0xFF800000> : vector<64xf32>
      %58 = vector.multi_reduction <maximumf>, %57, %cst_35 [1] : vector<64x128xf32> to vector<64xf32>
      %59 = vector.shape_cast %58 : vector<64xf32> to vector<64x1xf32>
      %60 = vector.broadcast %59 : vector<64x1xf32> to vector<64x128xf32>
      %61 = arith.subf %57, %60 : vector<64x128xf32>
      %62 = math.exp %61 : vector<64x128xf32>
      %c0_36 = arith.constant 0 : index
      %c0_37 = arith.constant 0 : index
      %63 = vector.load %arg9[%c0_36, %c0_37] : memref<64x128xf32, #tpu.memory_space<vmem>>, vector<64x128xf32>
      %64 = arith.mulf %63, %62 : vector<64x128xf32>
      %cst_38 = arith.constant dense<0.000000e+00> : vector<64xf32>
      %65 = vector.multi_reduction <add>, %64, %cst_38 [1] : vector<64x128xf32> to vector<64xf32>
      %66 = vector.shape_cast %65 : vector<64xf32> to vector<64x1xf32>
      %c0_39 = arith.constant 0 : index
      %c0_40 = arith.constant 0 : index
      %67 = vector.load %arg10[%c0_39, %c0_40] : memref<64x128xf32, #tpu.memory_space<vmem>>, vector<64x128xf32>
      %68 = arith.mulf %67, %62 : vector<64x128xf32>
      %cst_41 = arith.constant dense<0.000000e+00> : vector<64xf32>
      %69 = vector.multi_reduction <add>, %68, %cst_41 [1] : vector<64x128xf32> to vector<64xf32>
      %70 = vector.shape_cast %69 : vector<64xf32> to vector<64x1xf32>
      %c0_42 = arith.constant 0 : index
      %c0_43 = arith.constant 0 : index
      %71 = vector.load %arg11[%c0_42, %c0_43] : memref<64x128xf32, #tpu.memory_space<vmem>>, vector<64x128xf32>
      %72 = arith.mulf %71, %62 : vector<64x128xf32>
      %cst_44 = arith.constant dense<0.000000e+00> : vector<64xf32>
      %73 = vector.multi_reduction <add>, %72, %cst_44 [1] : vector<64x128xf32> to vector<64xf32>
      %74 = vector.shape_cast %73 : vector<64xf32> to vector<64x1xf32>
      %75 = tpu.reciprocal %66 {approx = true} : vector<64x1xf32> -> vector<64x1xf32>
      %76 = arith.mulf %70, %75 : vector<64x1xf32>
      %77 = arith.mulf %74, %75 : vector<64x1xf32>
      %78 = arith.mulf %76, %76 : vector<64x1xf32>
      %79 = arith.subf %77, %78 : vector<64x1xf32>
      %cst_45 = arith.constant 1.000000e-07 : f32
      %80 = vector.broadcast %cst_45 : f32 to vector<64x1xf32>
      %81 = arith.maximumf %79, %80 : vector<64x1xf32>
      %82 = math.sqrt %81 : vector<64x1xf32>
      %c0_46 = arith.constant 0 : index
      %c0_47 = arith.constant 0 : index
      %c0_48 = arith.constant 0 : index
      %83 = vector.load %arg7[%c0_46, %c0_47, %c0_48] : memref<1x128x1xf32, #tpu.memory_space<vmem>>, vector<1x64x1xf32>
      %84 = vector.shape_cast %83 : vector<1x64x1xf32> to vector<64x1xf32>
      %85 = vector.shape_cast %76 : vector<64x1xf32> to vector<1x64x1xf32>
      tpu.vector_store %arg7[%c0_46, %c0_47, %c0_48], %85 {strides = array<i32>} : memref<1x128x1xf32, #tpu.memory_space<vmem>>, vector<1x64x1xf32>,
      %c0_49 = arith.constant 0 : index
      %c64 = arith.constant 64 : index
      %c0_50 = arith.constant 0 : index
      %86 = vector.load %arg7[%c0_49, %c64, %c0_50] : memref<1x128x1xf32, #tpu.memory_space<vmem>>, vector<1x64x1xf32>
      %87 = vector.shape_cast %86 : vector<1x64x1xf32> to vector<64x1xf32>
      %88 = vector.shape_cast %82 : vector<64x1xf32> to vector<1x64x1xf32>
      tpu.vector_store %arg7[%c0_49, %c64, %c0_50], %88 {strides = array<i32>} : memref<1x128x1xf32, #tpu.memory_space<vmem>>, vector<1x64x1xf32>,
    } else {
    }
    return
  }
  func.func @transform_0(%arg0: i32, %arg1: i32) -> (i32, i32, i32) {
    %c0_i32 = arith.constant 0 : i32
    %c0_i32_0 = arith.constant 0 : i32
    return %arg0, %c0_i32, %arg1 : i32, i32, i32
  }
  func.func @transform_1(%arg0: i32, %arg1: i32) -> (i32, i32) {
    %c0_i32 = arith.constant 0 : i32
    %c0_i32_0 = arith.constant 0 : i32
    %c0_i32_1 = arith.constant 0 : i32
    return %c0_i32, %c0_i32_0 : i32, i32
  }
  func.func @transform_2(%arg0: i32, %arg1: i32) -> (i32, i32) {
    %c0_i32 = arith.constant 0 : i32
    %c0_i32_0 = arith.constant 0 : i32
    %c0_i32_1 = arith.constant 0 : i32
    return %c0_i32, %c0_i32_0 : i32, i32
  }
  func.func @transform_3(%arg0: i32, %arg1: i32) -> (i32, i32) {
    %c0_i32 = arith.constant 0 : i32
    %c0_i32_0 = arith.constant 0 : i32
    %c0_i32_1 = arith.constant 0 : i32
    return %c0_i32, %c0_i32_0 : i32, i32
  }
  func.func @transform_4(%arg0: i32, %arg1: i32) -> (i32, i32) {
    %c0_i32 = arith.constant 0 : i32
    %c0_i32_0 = arith.constant 0 : i32
    %c0_i32_1 = arith.constant 0 : i32
    return %c0_i32, %c0_i32_0 : i32, i32
  }
  func.func @transform_5(%arg0: i32, %arg1: i32) -> (i32, i32, i32) {
    %c0_i32 = arith.constant 0 : i32
    %c0_i32_0 = arith.constant 0 : i32
    %c0_i32_1 = arith.constant 0 : i32
    return %arg0, %c0_i32, %c0_i32_0 : i32, i32, i32
  }
}

</mosaic_0001>

<llo_original>
// kernel: astp_forward.1
$region0: #{astp_forward.1}
  #allocation0 [shape = 'u32[]', space=smem, size = 0x4, offset = 0x4, fixed_abs, tag = 'smem constant byte address 0x4 - core index']
  #allocation1 [shape = 'u32[144,128]{1,0:T(1,128)}', space=vmem, size = 0x12000, scoped, tag = 'internal scratch']
  #allocation2 [shape = 'f32[64,128]{1,0:T(8,128)}', space=vmem, size = 0x8000, scoped, tag = 'scratch operand']
  #allocation3 [shape = 'f32[64,128]{1,0:T(8,128)}', space=vmem, size = 0x8000, scoped, tag = 'scratch operand']
  #allocation4 [shape = 'f32[64,128]{1,0:T(8,128)}', space=vmem, size = 0x8000, scoped, tag = 'scratch operand']
  #allocation5 [shape = 'f32[64,128]{1,0:T(8,128)}', space=vmem, size = 0x8000, scoped, tag = 'scratch operand']
  %s0 = inlined_call_operand.hbm [shape: f32[2,64,128], index: 0, kind: input, shape index: {}]
  %s1 = inlined_call_operand.hbm [shape: bf16[128,64], index: 1, kind: input, shape index: {}]
  %s2 = inlined_call_operand.hbm [shape: f32[128,1], index: 2, kind: input, shape index: {}]
  %s3 = inlined_call_operand.hbm [shape: bf16[64,128], index: 3, kind: input, shape index: {}]
  %s4 = inlined_call_operand.hbm [shape: f32[64,1], index: 4, kind: input, shape index: {}]
  %s5 = inlined_call_operand.hbm [shape: f32[2,128,1], index: 5, kind: output, shape index: {}]
  %s6 = sld [smem:[#allocation0]]
  $region81: #{astp_forward.1} parent=0
    _
  %s8 = ssub.s32 1, %s6
  %s9 = scalar_select 0, %s8, %s6
  $region1: #{astp_forward.1} parent=0
    #allocation6 [shape = 'u8[65536]{0}', space=vmem, size = 0x10000, scoped, tag = 'input window, operand 0']
    #allocation7 [shape = 's32[2]{0}', space=sflag, size = 0x8, scoped, tag = 'scoped memory for astp_forward.1']
    #allocation8 [shape = 's32[2]{0}', space=sflag, size = 0x8, scoped, tag = 'scoped memory for astp_forward.1']
    #allocation9 [shape = 'u8[32768]{0}', space=vmem, size = 0x8000, scoped, tag = 'input window, operand 1, single buffered']
    #allocation10 [shape = 's32[1]{0}', space=sflag, size = 0x4, scoped, tag = 'scoped memory for astp_forward.1']
    #allocation11 [shape = 'u8[65536]{0}', space=vmem, size = 0x10000, scoped, tag = 'input window, operand 2, single buffered']
    #allocation12 [shape = 'u8[16384]{0}', space=vmem, size = 0x4000, scoped, tag = 'input window, operand 3, single buffered']
    #allocation13 [shape = 's32[1]{0}', space=sflag, size = 0x4, scoped, tag = 'scoped memory for astp_forward.1']
    #allocation14 [shape = 'u8[32768]{0}', space=vmem, size = 0x8000, scoped, tag = 'input window, operand 4, single buffered']
    #allocation15 [shape = 'u8[131072]{0}', space=vmem, size = 0x20000, scoped, tag = 'output window, operand 0']
    %10 = vsyncpa [#allocation7], 0
    %s11 = scalar_lea.sflag [#allocation7], 1
    %12 = vsyncpa %s11, 0
    %13 = vsyncpa [#allocation10], 0
    %14 = vsyncpa [#allocation13], 0
    %15 = vsyncpa [#allocation8], 0
    %s16 = scalar_lea.sflag [#allocation8], 1
    %17 = vsyncpa %s16, 0
    loop: start=0, step=1, limit=4
    $region2: #{astp_forward.1} parent=1 // loop_pre_header
      _
    $region3: #{astp_forward.1} parent=1 // loop_header
      %s19 = sphi 0, %s23
      %p20 = scmp.ge.s32.totalorder %s19, 4
      %s26 = sphi 0, %s38
      %s27 = sphi 0, %s34
      %s28 = sphi 0, %s26
      %s29 = sphi 0, %s27
      %s30 = sphi 0, %s28
      %s31 = sphi 0, %s29
      %s43 = sphi 0, %s45
      %s46 = sphi 0, %s43
      %s47 = sphi 0, %s46
      %s63 = sphi 0, %s47
      %s67 = sphi 0, %s67
      %s69 = sphi 0, %s67
      %s70 = sphi 0, %s69
      %s84 = sphi 0, %s70
      %s88 = sphi 0, %s88
      %s90 = sphi 0, %s88
      %s91 = sphi 0, %s90
      %s105 = sphi 0, %s91
      %s109 = sphi 0, %s109
      %s111 = sphi 0, %s109
      %s112 = sphi 0, %s111
      %s126 = sphi 0, %s112
      %s130 = sphi 0, %s130
      %s132 = sphi 0, %s130
      %s133 = sphi 0, %s132
      %s147 = sphi 0, %s133
      %s153 = sphi 0, %s155
      %s156 = sphi 0, %s153
      %s157 = sphi 0, %s156
      %s173 = sphi 0, %s157
    $region4: #{astp_forward.1} parent=1 // loop_header_branch
      %22 = sbr.rel (%p20) target = $region8
    $region5: #{astp_forward.1} parent=1 // loop_body
      %s24 = ssub.s32 %s19, 1
      %s25 = ssub.s32 %s19, 2
      %s32 = sadd.s32 1, %s27
      %p33 = scmp.ge.s32.totalorder %s32, 1
      %s34 = scalar_select %p33, 0, %s32
      %s35 = sadd.s32 1, %s26
      %s36 = scalar_select %p33, %s35, %s26
      %p37 = scmp.ge.s32.totalorder %s36, 2
      %s38 = scalar_select %p37, 0, %s36
      %s39 = ssub.s32 %s26, %s38
      %s40 = ssub.s32 %s27, %s34
      %s41 = sor.u32 %s39, %s40
      %p42 = scmp.eq.s32.totalorder %s41, 0
      %s44 = sadd.s32 %s43, 1
      %s45 = scalar_select %p42, %s43, %s44
      %p48 = pneg %p42
      %p49 = scmp.eq.s32.totalorder %s19, 1
      %p50 = por %p48, %p49
      %p51 = scmp.ne.s32.totalorder %s43, %s46
      %p52 = scmp.eq.s32.totalorder %s19, 0
      %p53 = por %p51, %p52
      %p54 = scmp.ne.s32.totalorder %s43, %s46
      %p55 = scmp.eq.s32.totalorder %s24, 1
      %p56 = por %p54, %p55
      %p57 = scmp.ne.s32.totalorder %s46, %s47
      %p58 = scmp.eq.s32.totalorder %s24, 0
      %p59 = por %p57, %p58
      %p60 = scmp.ne.s32.totalorder %s46, %s47
      %p61 = scmp.eq.s32.totalorder %s25, 1
      %p62 = por %p60, %p61
      %p64 = scmp.ne.s32.totalorder %s47, %s63
      %p65 = scmp.eq.s32.totalorder %s25, 0
      %p66 = por %p64, %p65
      %s68 = sadd.s32 %s67, 1
      %p71 = scmp.eq.s32.totalorder %s19, 1
      %p72 = scmp.ne.s32.totalorder %s67, %s69
      %p73 = scmp.eq.s32.totalorder %s19, 0
      %p74 = por %p72, %p73
      %p75 = scmp.ne.s32.totalorder %s67, %s69
      %p76 = scmp.eq.s32.totalorder %s24, 1
      %p77 = por %p75, %p76
      %p78 = scmp.ne.s32.totalorder %s69, %s70
      %p79 = scmp.eq.s32.totalorder %s24, 0
      %p80 = por %p78, %p79
      %p81 = scmp.ne.s32.totalorder %s69, %s70
      %p82 = scmp.eq.s32.totalorder %s25, 1
      %p83 = por %p81, %p82
      %p85 = scmp.ne.s32.totalorder %s70, %s84
      %p86 = scmp.eq.s32.totalorder %s25, 0
      %p87 = por %p85, %p86
      %s89 = sadd.s32 %s88, 1
      %p92 = scmp.eq.s32.totalorder %s19, 1
      %p93 = scmp.ne.s32.totalorder %s88, %s90
      %p94 = scmp.eq.s32.totalorder %s19, 0
      %p95 = por %p93, %p94
      %p96 = scmp.ne.s32.totalorder %s88, %s90
      %p97 = scmp.eq.s32.totalorder %s24, 1
      %p98 = por %p96, %p97
      %p99 = scmp.ne.s32.totalorder %s90, %s91
      %p100 = scmp.eq.s32.totalorder %s24, 0
      %p101 = por %p99, %p100
      %p102 = scmp.ne.s32.totalorder %s90, %s91
      %p103 = scmp.eq.s32.totalorder %s25, 1
      %p104 = por %p102, %p103
      %p106 = scmp.ne.s32.totalorder %s91, %s105
      %p107 = scmp.eq.s32.totalorder %s25, 0
      %p108 = por %p106, %p107
      %s110 = sadd.s32 %s109, 1
      %p113 = scmp.eq.s32.totalorder %s19, 1
      %p114 = scmp.ne.s32.totalorder %s109, %s111
      %p115 = scmp.eq.s32.totalorder %s19, 0
      %p116 = por %p114, %p115
      %p117 = scmp.ne.s32.totalorder %s109, %s111
      %p118 = scmp.eq.s32.totalorder %s24, 1
      %p119 = por %p117, %p118
      %p120 = scmp.ne.s32.totalorder %s111, %s112
      %p121 = scmp.eq.s32.totalorder %s24, 0
      %p122 = por %p120, %p121
      %p123 = scmp.ne.s32.totalorder %s111, %s112
      %p124 = scmp.eq.s32.totalorder %s25, 1
      %p125 = por %p123, %p124
      %p127 = scmp.ne.s32.totalorder %s112, %s126
      %p128 = scmp.eq.s32.totalorder %s25, 0
      %p129 = por %p127, %p128
      %s131 = sadd.s32 %s130, 1
      %p134 = scmp.eq.s32.totalorder %s19, 1
      %p135 = scmp.ne.s32.totalorder %s130, %s132
      %p136 = scmp.eq.s32.totalorder %s19, 0
      %p137 = por %p135, %p136
      %p138 = scmp.ne.s32.totalorder %s130, %s132
      %p139 = scmp.eq.s32.totalorder %s24, 1
      %p140 = por %p138, %p139
      %p141 = scmp.ne.s32.totalorder %s132, %s133
      %p142 = scmp.eq.s32.totalorder %s24, 0
      %p143 = por %p141, %p142
      %p144 = scmp.ne.s32.totalorder %s132, %s133
      %p145 = scmp.eq.s32.totalorder %s25, 1
      %p146 = por %p144, %p145
      %p148 = scmp.ne.s32.totalorder %s133, %s147
      %p149 = scmp.eq.s32.totalorder %s25, 0
      %p150 = por %p148, %p149
      %s151 = ssub.s32 %s26, %s38
      %p152 = scmp.eq.s32.totalorder %s151, 0
      %s154 = sadd.s32 %s153, 1
      %s155 = scalar_select %p152, %s153, %s154
      %p158 = pneg %p152
      %p159 = scmp.eq.s32.totalorder %s19, 1
      %p160 = por %p158, %p159
      %p161 = scmp.ne.s32.totalorder %s153, %s156
      %p162 = scmp.eq.s32.totalorder %s19, 0
      %p163 = por %p161, %p162
      %p164 = scmp.ne.s32.totalorder %s153, %s156
      %p165 = scmp.eq.s32.totalorder %s24, 1
      %p166 = por %p164, %p165
      %p167 = scmp.ne.s32.totalorder %s156, %s157
      %p168 = scmp.eq.s32.totalorder %s24, 0
      %p169 = por %p167, %p168
      %p170 = scmp.ne.s32.totalorder %s156, %s157
      %p171 = scmp.eq.s32.totalorder %s25, 1
      %p172 = por %p170, %p171
      %p174 = scmp.ne.s32.totalorder %s157, %s173
      %p175 = scmp.eq.s32.totalorder %s25, 0
      %p176 = por %p174, %p175
      %p177 = scmp.le.s32.totalorder 1, %s19
      %p178 = scmp.lt.s32.totalorder %s19, 3
      %p179 = pnand %p177, %p178
      %p180 = pneg %p179
      // Predicated region
      $region9: #{astp_forward.1} parent=5 // pred_check
        _
      $region10: #{astp_forward.1} parent=5 // pred_check_branch
        %182 = sbr.rel (%p179) target = $region12
      $region11: #{astp_forward.1} parent=5 // pred_region
        %s183 = ssub.s32 %s19, 1
        // Predicated region
        $region13: #{astp_forward.1} parent=11 // pred_check
          %p184 = pneg %p80
        $region14: #{astp_forward.1} parent=11 // pred_check_branch
          %186 = sbr.rel (%p184) target = $region16
        $region15: #{astp_forward.1} parent=11 // pred_region
          %s188 = ssub.s32 1024, 1024
          %189 = vsyncadd [#allocation10], %s188
          %s190 = sshll.u32 [#allocation9], 4
          %s191 = int_to_ptr.vmem [resolvable:$true] %s190
          %196 = dma.hbm_to_vmem [thread:$0]  %s1, 1024, %s191, [#allocation10], 64, 64, 4
        $region16: #{astp_forward.1} parent=11 // pred_fallthru
          _
        // Predicated region
        $region17: #{astp_forward.1} parent=11 // pred_check
          %p197 = pneg %p101
        $region18: #{astp_forward.1} parent=11 // pred_check_branch
          %199 = sbr.rel (%p197) target = $region20
        $region19: #{astp_forward.1} parent=11 // pred_region
          %s201 = ssub.s32 2048, 2048
          %202 = vsyncadd [#allocation10], %s201
          %s203 = sshll.u32 [#allocation11], 4
          %s204 = int_to_ptr.vmem [resolvable:$true] %s203
          %209 = dma.hbm_to_vmem [thread:$0]  %s2, 2048, %s204, [#allocation10], 128, 128, 8
        $region20: #{astp_forward.1} parent=11 // pred_fallthru
          _
        // Predicated region
        $region21: #{astp_forward.1} parent=11 // pred_check
          %p210 = pneg %p122
        $region22: #{astp_forward.1} parent=11 // pred_check_branch
          %212 = sbr.rel (%p210) target = $region24
        $region23: #{astp_forward.1} parent=11 // pred_region
          %s214 = ssub.s32 512, 512
          %215 = vsyncadd [#allocation13], %s214
          %s216 = sshll.u32 [#allocation12], 4
          %s217 = int_to_ptr.vmem [resolvable:$true] %s216
          %222 = dma.hbm_to_vmem [thread:$0]  %s3, 512, %s217, [#allocation13], 64, 64, 4
        $region24: #{astp_forward.1} parent=11 // pred_fallthru
          _
        // Predicated region
        $region25: #{astp_forward.1} parent=11 // pred_check
          %p223 = pneg %p143
        $region26: #{astp_forward.1} parent=11 // pred_check_branch
          %225 = sbr.rel (%p223) target = $region28
        $region27: #{astp_forward.1} parent=11 // pred_region
          %s227 = ssub.s32 1024, 1024
          %228 = vsyncadd [#allocation13], %s227
          %s229 = sshll.u32 [#allocation14], 4
          %s230 = int_to_ptr.vmem [resolvable:$true] %s229
          %235 = dma.hbm_to_vmem [thread:$0]  %s4, 1024, %s230, [#allocation13], 128, 128, 8
        $region28: #{astp_forward.1} parent=11 // pred_fallthru
          _
      $region12: #{astp_forward.1} parent=5 // pred_fallthru
        _
      %p236 = scmp.lt.s32.totalorder %s19, 2
      // Predicated region
      $region29: #{astp_forward.1} parent=5 // pred_check
        %p237 = pneg %p236
      $region30: #{astp_forward.1} parent=5 // pred_check_branch
        %239 = sbr.rel (%p237) target = $region32
      $region31: #{astp_forward.1} parent=5 // pred_region
        // Predicated region
        $region33: #{astp_forward.1} parent=31 // pred_check
          %p240 = pneg %p53
        $region34: #{astp_forward.1} parent=31 // pred_check_branch
          %242 = sbr.rel (%p240) target = $region36
        $region35: #{astp_forward.1} parent=31 // pred_region
          %s243 = sand.u32 %s43, 1
          %s244 = scalar_lea.sflag [#allocation7], %s243
          %s245 = sand.u32 %s43, 1
          %s246 = smul.addr %s245, 64
          %s247 = scalar_lea.vmem [#allocation6], %s246
          %s249 = ssub.s32 1024, 1024
          %250 = vsyncadd %s244, %s249
          %s251 = smul.addr %s26, 8
          %s252 = sadd.s32 %s27, %s251
          %s253 = smul.addr %s252, 128
          %s254 = scalar_lea.hbm %s0, %s253
          %s255 = sshll.u32 %s247, 4
          %s256 = int_to_ptr.vmem [resolvable:$true] %s255
          %261 = dma.hbm_to_vmem [thread:$0]  %s254, 1024, %s256, %s244, 128, 128, 8
        $region36: #{astp_forward.1} parent=31 // pred_fallthru
          _
      $region32: #{astp_forward.1} parent=5 // pred_fallthru
        _
      %p262 = scmp.le.s32.totalorder 1, %s19
      %p263 = scmp.lt.s32.totalorder %s19, 3
      %p264 = pnand %p262, %p263
      %p265 = pneg %p264
      // Predicated region
      $region37: #{astp_forward.1} parent=5 // pred_check
        _
      $region38: #{astp_forward.1} parent=5 // pred_check_branch
        %267 = sbr.rel (%p264) target = $region40
      $region39: #{astp_forward.1} parent=5 // pred_region
        %s268 = ssub.s32 %s19, 1
        %s269 = sand.u32 %s46, 1
        %s270 = scalar_lea.sflag [#allocation7], %s269
        %s271 = sand.u32 %s46, 1
        %s272 = smul.addr %s271, 64
        %s273 = scalar_lea.vmem [#allocation6], %s272
        // Predicated region
        $region41: #{astp_forward.1} parent=39 // pred_check
          %p274 = pneg %p59
        $region42: #{astp_forward.1} parent=39 // pred_check_branch
          %276 = sbr.rel (%p274) target = $region44
        $region43: #{astp_forward.1} parent=39 // pred_region
          %277 = dma.done %s270, 1024
        $region44: #{astp_forward.1} parent=39 // pred_fallthru
          _
        // Predicated region
        $region45: #{astp_forward.1} parent=39 // pred_check
          %p278 = pneg %p80
        $region46: #{astp_forward.1} parent=39 // pred_check_branch
          %280 = sbr.rel (%p278) target = $region48
        $region47: #{astp_forward.1} parent=39 // pred_region
          %281 = dma.done [#allocation10], 1024
        $region48: #{astp_forward.1} parent=39 // pred_fallthru
          _
        // Predicated region
        $region49: #{astp_forward.1} parent=39 // pred_check
          %p282 = pneg %p101
        $region50: #{astp_forward.1} parent=39 // pred_check_branch
          %284 = sbr.rel (%p282) target = $region52
        $region51: #{astp_forward.1} parent=39 // pred_region
          %285 = dma.done [#allocation10], 2048
        $region52: #{astp_forward.1} parent=39 // pred_fallthru
          _
        // Predicated region
        $region53: #{astp_forward.1} parent=39 // pred_check
          %p286 = pneg %p122
        $region54: #{astp_forward.1} parent=39 // pred_check_branch
          %288 = sbr.rel (%p286) target = $region56
        $region55: #{astp_forward.1} parent=39 // pred_region
          %289 = dma.done [#allocation13], 512
        $region56: #{astp_forward.1} parent=39 // pred_fallthru
          _
        // Predicated region
        $region57: #{astp_forward.1} parent=39 // pred_check
          %p290 = pneg %p143
        $region58: #{astp_forward.1} parent=39 // pred_check_branch
          %292 = sbr.rel (%p290) target = $region60
        $region59: #{astp_forward.1} parent=39 // pred_region
          %293 = dma.done [#allocation13], 1024
        $region60: #{astp_forward.1} parent=39 // pred_fallthru
          _
        %s294 = sand.u32 %s46, 1
        %s295 = scalar_lea.sflag [#allocation7], %s294
        %s296 = sand.u32 %s46, 1
        %s297 = smul.addr %s296, 64
        %s298 = scalar_lea.vmem [#allocation6], %s297
        %p299 = pneg %p59
        %p300 = pneg %p56
        %p301 = pneg %p80
        %p302 = pneg %p77
        %p303 = pneg %p101
        %p304 = pneg %p98
        %p305 = pneg %p122
        %p306 = pneg %p119
        %p307 = pneg %p143
        %p308 = pneg %p140
        %p309 = pneg %p169
        %p310 = pneg %p166
        %s311 = sand.u32 %s156, 1
        %s312 = scalar_lea.sflag [#allocation8], %s311
        %s313 = sand.u32 %s156, 1
        %s314 = smul.addr %s313, 128
        %s315 = scalar_lea.vmem [#allocation15], %s314
        %p317 = scmp.eq.s32.totalorder %s29, 0
        // Predicated region
        $region61: #{astp_forward.1} parent=39 // pred_check
          %p318 = pneg %p317
        $region62: #{astp_forward.1} parent=39 // pred_check_branch
          %320 = sbr.rel (%p318) target = $region64
        $region63: #{astp_forward.1} parent=39 // pred_region
          %321 = vst [vmem:[#allocation2] sm:$0xff] -1e+30
          %322 = vst [vmem:[#allocation2 + $0x8] sm:$0xff] -1e+30
          %323 = vst [vmem:[#allocation2 + $0x10] sm:$0xff] -1e+30
          %324 = vst [vmem:[#allocation2 + $0x18] sm:$0xff] -1e+30
          %325 = vst [vmem:[#allocation2 + $0x20] sm:$0xff] -1e+30
          %326 = vst [vmem:[#allocation2 + $0x28] sm:$0xff] -1e+30
          %327 = vst [vmem:[#allocation2 + $0x30] sm:$0xff] -1e+30
          %328 = vst [vmem:[#allocation2 + $0x38] sm:$0xff] -1e+30
          %329 = vst [vmem:[#allocation3] sm:$0xff] 0.0
          %330 = vst [vmem:[#allocation3 + $0x8] sm:$0xff] 0.0
          %331 = vst [vmem:[#allocation3 + $0x10] sm:$0xff] 0.0
          %332 = vst [vmem:[#allocation3 + $0x18] sm:$0xff] 0.0
          %333 = vst [vmem:[#allocation3 + $0x20] sm:$0xff] 0.0
          %334 = vst [vmem:[#allocation3 + $0x28] sm:$0xff] 0.0
          %335 = vst [vmem:[#allocation3 + $0x30] sm:$0xff] 0.0
          %336 = vst [vmem:[#allocation3 + $0x38] sm:$0xff] 0.0
          %337 = vst [vmem:[#allocation4] sm:$0xff] 0.0
          %338 = vst [vmem:[#allocation4 + $0x8] sm:$0xff] 0.0
          %339 = vst [vmem:[#allocation4 + $0x10] sm:$0xff] 0.0
          %340 = vst [vmem:[#allocation4 + $0x18] sm:$0xff] 0.0
          %341 = vst [vmem:[#allocation4 + $0x20] sm:$0xff] 0.0
          %342 = vst [vmem:[#allocation4 + $0x28] sm:$0xff] 0.0
          %343 = vst [vmem:[#allocation4 + $0x30] sm:$0xff] 0.0
          %344 = vst [vmem:[#allocation4 + $0x38] sm:$0xff] 0.0
          %345 = vst [vmem:[#allocation5] sm:$0xff] 0.0
          %346 = vst [vmem:[#allocation5 + $0x8] sm:$0xff] 0.0
          %347 = vst [vmem:[#allocation5 + $0x10] sm:$0xff] 0.0
          %348 = vst [vmem:[#allocation5 + $0x18] sm:$0xff] 0.0
          %349 = vst [vmem:[#allocation5 + $0x20] sm:$0xff] 0.0
          %350 = vst [vmem:[#allocation5 + $0x28] sm:$0xff] 0.0
          %351 = vst [vmem:[#allocation5 + $0x30] sm:$0xff] 0.0
          %352 = vst [vmem:[#allocation5 + $0x38] sm:$0xff] 0.0
        $region64: #{astp_forward.1} parent=39 // pred_fallthru
          _
        %v353 = vld [vmem:[%s273] sm:$0xff]
        %v354 = vld [vmem:[%s273 + $0x8] sm:$0xff]
        %v355 = vld [vmem:[%s273 + $0x10] sm:$0xff]
        %v356 = vld [vmem:[%s273 + $0x18] sm:$0xff]
        %v357 = vld [vmem:[%s273 + $0x20] sm:$0xff]
        %v358 = vld [vmem:[%s273 + $0x28] sm:$0xff]
        %v359 = vld [vmem:[%s273 + $0x30] sm:$0xff]
        %v360 = vld [vmem:[%s273 + $0x38] sm:$0xff]
        %v361 = vpack.c.bf16 %v354, %v353
        %v362 = vpack.c.bf16 %v356, %v355
        %v363 = vpack.c.bf16 %v358, %v357
        %v364 = vpack.c.bf16 %v360, %v359
        %v365 = vld [vmem:[#allocation9] sm:$0xf]
        %v366 = vld [vmem:[#allocation9 + $0x4] sm:$0xf]
        %v367 = vld [vmem:[#allocation9 + $0x8] sm:$0xf]
        %v368 = vld [vmem:[#allocation9 + $0xc] sm:$0xf]
        %v369 = vld [vmem:[#allocation9 + $0x10] sm:$0xf]
        %v370 = vld [vmem:[#allocation9 + $0x14] sm:$0xf]
        %v371 = vld [vmem:[#allocation9 + $0x18] sm:$0xf]
        %v372 = vld [vmem:[#allocation9 + $0x1c] sm:$0xf]
        %v373 = vld [vmem:[#allocation9 + $0x20] sm:$0xf]
        %v374 = vld [vmem:[#allocation9 + $0x24] sm:$0xf]
        %v375 = vld [vmem:[#allocation9 + $0x28] sm:$0xf]
        %v376 = vld [vmem:[#allocation9 + $0x2c] sm:$0xf]
        %v377 = vld [vmem:[#allocation9 + $0x30] sm:$0xf]
        %v378 = vld [vmem:[#allocation9 + $0x34] sm:$0xf]
        %v379 = vld [vmem:[#allocation9 + $0x38] sm:$0xf]
        %v380 = vld [vmem:[#allocation9 + $0x3c] sm:$0xf]
        %v381 = vld [vmem:[#allocation11] sm:$0xff]
        %v382 = vld [vmem:[#allocation11 + $0x8] sm:$0xff]
        %v383 = vld [vmem:[#allocation11 + $0x10] sm:$0xff]
        %v384 = vld [vmem:[#allocation11 + $0x18] sm:$0xff]
        %v385 = vld [vmem:[#allocation11 + $0x20] sm:$0xff]
        %v386 = vld [vmem:[#allocation11 + $0x28] sm:$0xff]
        %v387 = vld [vmem:[#allocation11 + $0x30] sm:$0xff]
        %v388 = vld [vmem:[#allocation11 + $0x38] sm:$0xff]
        %v389 = vld [vmem:[#allocation11 + $0x40] sm:$0xff]
        %v390 = vld [vmem:[#allocation11 + $0x48] sm:$0xff]
        %v391 = vld [vmem:[#allocation11 + $0x50] sm:$0xff]
        %v392 = vld [vmem:[#allocation11 + $0x58] sm:$0xff]
        %v393 = vld [vmem:[#allocation11 + $0x60] sm:$0xff]
        %v394 = vld [vmem:[#allocation11 + $0x68] sm:$0xff]
        %v395 = vld [vmem:[#allocation11 + $0x70] sm:$0xff]
        %v396 = vld [vmem:[#allocation11 + $0x78] sm:$0xff]
        %398 = vset.pattern.permute.xlu0 0
        %399 = vperm.xlu0 %398, %v381
        %v400 = vpop.permute.xlu0 %399
        %403 = vset.pattern.permute.xlu0 0
        %404 = vperm.xlu0 %403, %v382
        %v405 = vpop.permute.xlu0 %404
        %408 = vset.pattern.permute.xlu0 0
        %409 = vperm.xlu0 %408, %v383
        %v410 = vpop.permute.xlu0 %409
        %413 = vset.pattern.permute.xlu0 0
        %414 = vperm.xlu0 %413, %v384
        %v415 = vpop.permute.xlu0 %414
        %418 = vset.pattern.permute.xlu0 0
        %419 = vperm.xlu0 %418, %v385
        %v420 = vpop.permute.xlu0 %419
        %423 = vset.pattern.permute.xlu0 0
        %424 = vperm.xlu0 %423, %v386
        %v425 = vpop.permute.xlu0 %424
        %428 = vset.pattern.permute.xlu0 0
        %429 = vperm.xlu0 %428, %v387
        %v430 = vpop.permute.xlu0 %429
        %433 = vset.pattern.permute.xlu0 0
        %434 = vperm.xlu0 %433, %v388
        %v435 = vpop.permute.xlu0 %434
        %438 = vset.pattern.permute.xlu0 0
        %439 = vperm.xlu0 %438, %v389
        %v440 = vpop.permute.xlu0 %439
        %443 = vset.pattern.permute.xlu0 0
        %444 = vperm.xlu0 %443, %v390
        %v445 = vpop.permute.xlu0 %444
        %448 = vset.pattern.permute.xlu0 0
        %449 = vperm.xlu0 %448, %v391
        %v450 = vpop.permute.xlu0 %449
        %453 = vset.pattern.permute.xlu0 0
        %454 = vperm.xlu0 %453, %v392
        %v455 = vpop.permute.xlu0 %454
        %458 = vset.pattern.permute.xlu0 0
        %459 = vperm.xlu0 %458, %v393
        %v460 = vpop.permute.xlu0 %459
        %463 = vset.pattern.permute.xlu0 0
        %464 = vperm.xlu0 %463, %v394
        %v465 = vpop.permute.xlu0 %464
        %468 = vset.pattern.permute.xlu0 0
        %469 = vperm.xlu0 %468, %v395
        %v470 = vpop.permute.xlu0 %469
        %473 = vset.pattern.permute.xlu0 0
        %474 = vperm.xlu0 %473, %v396
        %v475 = vpop.permute.xlu0 %474
        %v493 = vunpack.c.l.b16 %v365
        %v494 = vunpack.c.l.b16 %v366
        %v495 = vunpack.c.l.b16 %v367
        %v496 = vunpack.c.l.b16 %v368
        %v497 = vunpack.c.l.b16 %v369
        %v498 = vunpack.c.l.b16 %v370
        %v499 = vunpack.c.l.b16 %v371
        %v500 = vunpack.c.l.b16 %v372
        %v501 = vunpack.c.l.b16 %v373
        %v502 = vunpack.c.l.b16 %v374
        %v503 = vunpack.c.l.b16 %v375
        %v504 = vunpack.c.l.b16 %v376
        %v505 = vunpack.c.l.b16 %v377
        %v506 = vunpack.c.l.b16 %v378
        %v507 = vunpack.c.l.b16 %v379
        %v508 = vunpack.c.l.b16 %v380
        %v509 = vpack.c.b16 %v494, %v493
        %v510 = vpack.c.b16 %v496, %v495
        %v511 = vpack.c.b16 %v498, %v497
        %v512 = vpack.c.b16 %v500, %v499
        %v513 = vpack.c.b16 %v502, %v501
        %v514 = vpack.c.b16 %v504, %v503
        %v515 = vpack.c.b16 %v506, %v505
        %v516 = vpack.c.b16 %v508, %v507
        %vm517 = vcmask 523264
        %v519 = vsel %vm517, %v509, 0
        %v522 = vsel %vm517, %v510, 0
        %v525 = vsel %vm517, %v511, 0
        %v528 = vsel %vm517, %v512, 0
        %v531 = vsel %vm517, %v513, 0
        %v534 = vsel %vm517, %v514, 0
        %v537 = vsel %vm517, %v515, 0
        %v540 = vsel %vm517, %v516, 0
        %542 = vmatprep.subr.bf16.mxu0 0
        %543 = vmatpush1.bf16.msra.mxu0 %v361
        %544 = vmatprep.subr.bf16.mxu0 0
        %545 = vmatpush1.bf16.msra.mxu0 %v362
        %546 = vmatprep.subr.bf16.mxu0 0
        %547 = vmatpush1.bf16.msra.mxu0 %v363
        %548 = vmatprep.subr.bf16.mxu0 0
        %549 = vmatpush1.bf16.msra.mxu0 %v364
        %550 = vmatprep.subr.bf16.mxu0 0
        %551 = vmatpush1.bf16.msra.mxu0 0
        %552 = vmatprep.subr.bf16.mxu0 0
        %553 = vmatpush1.bf16.msra.mxu0 0
        %554 = vmatprep.subr.bf16.mxu0 0
        %555 = vmatpush1.bf16.msra.mxu0 0
        %556 = vmatprep.subr.bf16.mxu0 0
        %557 = vmatpush1.bf16.msra.mxu0 0
        %558 = vmatprep.subr.bf16.mxu0 0
        %559 = vmatpush1.bf16.msra.mxu0 0
        %560 = vmatprep.subr.bf16.mxu0 0
        %561 = vmatpush1.bf16.msra.mxu0 0
        %562 = vmatprep.subr.bf16.mxu0 0
        %563 = vmatpush1.bf16.msra.mxu0 0
        %564 = vmatprep.subr.bf16.mxu0 0
        %565 = vmatpush1.bf16.msra.mxu0 0
        %566 = vmatprep.subr.bf16.mxu0 0
        %567 = vmatpush1.bf16.msra.mxu0 0
        %568 = vmatprep.subr.bf16.mxu0 0
        %569 = vmatpush1.bf16.msra.mxu0 0
        %570 = vmatprep.subr.bf16.mxu0 0
        %571 = vmatpush1.bf16.msra.mxu0 0
        %572 = vmatprep.subr.bf16.mxu0 0
        %573 = vmatpush1.bf16.msra.mxu0 0
        %574 = vmatprep.mubr.bf16.mxu0 0
        %575 = vmatmul.mubr.bf16.gmra.mrb[0].mxu0 %v519
        %v576 = vpop.f32.mrb[0].mxu0
        %v577 = vadd.f32 %v400, %v576
        %v578 = vpop.f32.mrb[0].mxu0
        %v579 = vpop.f32.mrb[0].mxu0
        %v580 = vadd.f32 %v405, %v579
        %v581 = vpop.f32.mrb[0].mxu0
        %582 = vmatprep.mubr.bf16.mxu0 0
        %583 = vmatmul.mubr.bf16.gmra.mrb[0].mxu0 %v522
        %v584 = vpop.f32.mrb[0].mxu0
        %v585 = vadd.f32 %v410, %v584
        %v586 = vpop.f32.mrb[0].mxu0
        %v587 = vpop.f32.mrb[0].mxu0
        %v588 = vadd.f32 %v415, %v587
        %v589 = vpop.f32.mrb[0].mxu0
        %590 = vmatprep.mubr.bf16.mxu0 0
        %591 = vmatmul.mubr.bf16.gmra.mrb[0].mxu0 %v525
        %v592 = vpop.f32.mrb[0].mxu0
        %v593 = vadd.f32 %v420, %v592
        %v594 = vpop.f32.mrb[0].mxu0
        %v595 = vpop.f32.mrb[0].mxu0
        %v596 = vadd.f32 %v425, %v595
        %v597 = vpop.f32.mrb[0].mxu0
        %598 = vmatprep.mubr.bf16.mxu0 0
        %599 = vmatmul.mubr.bf16.gmra.mrb[0].mxu0 %v528
        %v600 = vpop.f32.mrb[0].mxu0
        %v601 = vadd.f32 %v430, %v600
        %v602 = vpop.f32.mrb[0].mxu0
        %v603 = vpop.f32.mrb[0].mxu0
        %v604 = vadd.f32 %v435, %v603
        %v605 = vpop.f32.mrb[0].mxu0
        %606 = vmatprep.mubr.bf16.mxu0 0
        %607 = vmatmul.mubr.bf16.gmra.mrb[0].mxu0 %v531
        %v608 = vpop.f32.mrb[0].mxu0
        %v609 = vadd.f32 %v440, %v608
        %v610 = vpop.f32.mrb[0].mxu0
        %v611 = vpop.f32.mrb[0].mxu0
        %v612 = vadd.f32 %v445, %v611
        %v613 = vpop.f32.mrb[0].mxu0
        %614 = vmatprep.mubr.bf16.mxu0 0
        %615 = vmatmul.mubr.bf16.gmra.mrb[0].mxu0 %v534
        %v616 = vpop.f32.mrb[0].mxu0
        %v617 = vadd.f32 %v450, %v616
        %v618 = vpop.f32.mrb[0].mxu0
        %v619 = vpop.f32.mrb[0].mxu0
        %v620 = vadd.f32 %v455, %v619
        %v621 = vpop.f32.mrb[0].mxu0
        %622 = vmatprep.mubr.bf16.mxu0 0
        %623 = vmatmul.mubr.bf16.gmra.mrb[0].mxu0 %v537
        %v624 = vpop.f32.mrb[0].mxu0
        %v625 = vadd.f32 %v460, %v624
        %v626 = vpop.f32.mrb[0].mxu0
        %v627 = vpop.f32.mrb[0].mxu0
        %v628 = vadd.f32 %v465, %v627
        %v629 = vpop.f32.mrb[0].mxu0
        %630 = vmatprep.mubr.bf16.mxu0 0
        %631 = vmatmul.mubr.bf16.gmra.mrb[0].mxu0 %v540
        %v632 = vpop.f32.mrb[0].mxu0
        %v633 = vadd.f32 %v470, %v632
        %v634 = vpop.f32.mrb[0].mxu0
        %v635 = vpop.f32.mrb[0].mxu0
        %v636 = vadd.f32 %v475, %v635
        %v637 = vpop.f32.mrb[0].mxu0
        %638 = vdwg.mxu0
        %v639 = vtanh.pop %v577
        %v640 = vtanh.pop %v580
        %v641 = vtanh.pop %v585
        %v642 = vtanh.pop %v588
        %v643 = vtanh.pop %v593
        %v644 = vtanh.pop %v596
        %v645 = vtanh.pop %v601
        %v646 = vtanh.pop %v604
        %v647 = vtanh.pop %v609
        %v648 = vtanh.pop %v612
        %v649 = vtanh.pop %v617
        %v650 = vtanh.pop %v620
        %v651 = vtanh.pop %v625
        %v652 = vtanh.pop %v628
        %v653 = vtanh.pop %v633
        %v654 = vtanh.pop %v636
        %v655 = vld [vmem:[#allocation12] sm:$0xf]
        %v656 = vld [vmem:[#allocation12 + $0x4] sm:$0xf]
        %v657 = vld [vmem:[#allocation12 + $0x8] sm:$0xf]
        %v658 = vld [vmem:[#allocation12 + $0xc] sm:$0xf]
        %v659 = vld [vmem:[#allocation12 + $0x10] sm:$0xf]
        %v660 = vld [vmem:[#allocation12 + $0x14] sm:$0xf]
        %v661 = vld [vmem:[#allocation12 + $0x18] sm:$0xf]
        %v662 = vld [vmem:[#allocation12 + $0x1c] sm:$0xf]
        %v663 = vpack.c.bf16 %v640, %v639
        %v664 = vpack.c.bf16 %v642, %v641
        %v665 = vpack.c.bf16 %v644, %v643
        %v666 = vpack.c.bf16 %v646, %v645
        %v667 = vpack.c.bf16 %v648, %v647
        %v668 = vpack.c.bf16 %v650, %v649
        %v669 = vpack.c.bf16 %v652, %v651
        %v670 = vpack.c.bf16 %v654, %v653
        %v671 = vld [vmem:[#allocation14] sm:$0xff]
        %v672 = vld [vmem:[#allocation14 + $0x8] sm:$0xff]
        %v673 = vld [vmem:[#allocation14 + $0x10] sm:$0xff]
        %v674 = vld [vmem:[#allocation14 + $0x18] sm:$0xff]
        %v675 = vld [vmem:[#allocation14 + $0x20] sm:$0xff]
        %v676 = vld [vmem:[#allocation14 + $0x28] sm:$0xff]
        %v677 = vld [vmem:[#allocation14 + $0x30] sm:$0xff]
        %v678 = vld [vmem:[#allocation14 + $0x38] sm:$0xff]
        %680 = vset.pattern.permute.xlu0 0
        %681 = vperm.xlu0 %680, %v671
        %v682 = vpop.permute.xlu0 %681
        %685 = vset.pattern.permute.xlu0 0
        %686 = vperm.xlu0 %685, %v672
        %v687 = vpop.permute.xlu0 %686
        %690 = vset.pattern.permute.xlu0 0
        %691 = vperm.xlu0 %690, %v673
        %v692 = vpop.permute.xlu0 %691
        %695 = vset.pattern.permute.xlu0 0
        %696 = vperm.xlu0 %695, %v674
        %v697 = vpop.permute.xlu0 %696
        %700 = vset.pattern.permute.xlu0 0
        %701 = vperm.xlu0 %700, %v675
        %v702 = vpop.permute.xlu0 %701
        %705 = vset.pattern.permute.xlu0 0
        %706 = vperm.xlu0 %705, %v676
        %v707 = vpop.permute.xlu0 %706
        %710 = vset.pattern.permute.xlu0 0
        %711 = vperm.xlu0 %710, %v677
        %v712 = vpop.permute.xlu0 %711
        %715 = vset.pattern.permute.xlu0 0
        %716 = vperm.xlu0 %715, %v678
        %v717 = vpop.permute.xlu0 %716
        %v727 = vunpack.c.l.b16 %v655
        %v728 = vunpack.c.l.b16 %v656
        %v729 = vunpack.c.l.b16 %v657
        %v730 = vunpack.c.l.b16 %v658
        %v731 = vunpack.c.l.b16 %v659
        %v732 = vunpack.c.l.b16 %v660
        %v733 = vunpack.c.l.b16 %v661
        %v734 = vunpack.c.l.b16 %v662
        %v735 = vpack.c.b16 %v728, %v727
        %v736 = vpack.c.b16 %v730, %v729
        %v737 = vpack.c.b16 %v732, %v731
        %v738 = vpack.c.b16 %v734, %v733
        %743 = vmatprep.subr.bf16.mxu0 0
        %744 = vmatpush1.bf16.msra.mxu0 %v663
        %745 = vmatprep.subr.bf16.mxu0 0
        %746 = vmatpush1.bf16.msra.mxu0 %v664
        %747 = vmatprep.subr.bf16.mxu0 0
        %748 = vmatpush1.bf16.msra.mxu0 %v665
        %749 = vmatprep.subr.bf16.mxu0 0
        %750 = vmatpush1.bf16.msra.mxu0 %v666
        %751 = vmatprep.subr.bf16.mxu0 0
        %752 = vmatpush1.bf16.msra.mxu0 %v667
        %753 = vmatprep.subr.bf16.mxu0 0
        %754 = vmatpush1.bf16.msra.mxu0 %v668
        %755 = vmatprep.subr.bf16.mxu0 0
        %756 = vmatpush1.bf16.msra.mxu0 %v669
        %757 = vmatprep.subr.bf16.mxu0 0
        %758 = vmatpush1.bf16.msra.mxu0 %v670
        %759 = vmatprep.subr.bf16.mxu0 0
        %760 = vmatpush1.bf16.msra.mxu0 0
        %761 = vmatprep.subr.bf16.mxu0 0
        %762 = vmatpush1.bf16.msra.mxu0 0
        %763 = vmatprep.subr.bf16.mxu0 0
        %764 = vmatpush1.bf16.msra.mxu0 0
        %765 = vmatprep.subr.bf16.mxu0 0
        %766 = vmatpush1.bf16.msra.mxu0 0
        %767 = vmatprep.subr.bf16.mxu0 0
        %768 = vmatpush1.bf16.msra.mxu0 0
        %769 = vmatprep.subr.bf16.mxu0 0
        %770 = vmatpush1.bf16.msra.mxu0 0
        %771 = vmatprep.subr.bf16.mxu0 0
        %772 = vmatpush1.bf16.msra.mxu0 0
        %773 = vmatprep.subr.bf16.mxu0 0
        %774 = vmatpush1.bf16.msra.mxu0 0
        %775 = vmatprep.mubr.bf16.mxu0 0
        %776 = vmatmul.mubr.bf16.gmra.mrb[0].mxu0 %v735
        %v777 = vpop.f32.mrb[0].mxu0
        %v778 = vadd.f32 %v682, %v777
        %v779 = vpop.f32.mrb[0].mxu0
        %v780 = vpop.f32.mrb[0].mxu0
        %v781 = vadd.f32 %v687, %v780
        %v782 = vpop.f32.mrb[0].mxu0
        %783 = vmatprep.mubr.bf16.mxu0 0
        %784 = vmatmul.mubr.bf16.gmra.mrb[0].mxu0 %v736
        %v785 = vpop.f32.mrb[0].mxu0
        %v786 = vadd.f32 %v692, %v785
        %v787 = vpop.f32.mrb[0].mxu0
        %v788 = vpop.f32.mrb[0].mxu0
        %v789 = vadd.f32 %v697, %v788
        %v790 = vpop.f32.mrb[0].mxu0
        %791 = vmatprep.mubr.bf16.mxu0 0
        %792 = vmatmul.mubr.bf16.gmra.mrb[0].mxu0 %v737
        %v793 = vpop.f32.mrb[0].mxu0
        %v794 = vadd.f32 %v702, %v793
        %v795 = vpop.f32.mrb[0].mxu0
        %v796 = vpop.f32.mrb[0].mxu0
        %v797 = vadd.f32 %v707, %v796
        %v798 = vpop.f32.mrb[0].mxu0
        %799 = vmatprep.mubr.bf16.mxu0 0
        %800 = vmatmul.mubr.bf16.gmra.mrb[0].mxu0 %v738
        %v801 = vpop.f32.mrb[0].mxu0
        %v802 = vadd.f32 %v712, %v801
        %v803 = vpop.f32.mrb[0].mxu0
        %v804 = vpop.f32.mrb[0].mxu0
        %v805 = vadd.f32 %v717, %v804
        %v806 = vpop.f32.mrb[0].mxu0
        %807 = vdwg.mxu0
        %v808 = vlaneseq
        %v809 = vand.u32 %v808, 127
        %v810 = vld [vmem:[#allocation2] sm:$0xff]
        %v811 = vld [vmem:[#allocation2 + $0x8] sm:$0xff]
        %v812 = vld [vmem:[#allocation2 + $0x10] sm:$0xff]
        %v813 = vld [vmem:[#allocation2 + $0x18] sm:$0xff]
        %v814 = vld [vmem:[#allocation2 + $0x20] sm:$0xff]
        %v815 = vld [vmem:[#allocation2 + $0x28] sm:$0xff]
        %v816 = vld [vmem:[#allocation2 + $0x30] sm:$0xff]
        %v817 = vld [vmem:[#allocation2 + $0x38] sm:$0xff]
        %s818 = smul.u32 %s29, 128
        %v819 = vstv %s818
        %v820 = vadd.s32 %v819, %v809
        %vm821 = vcmp.lt.s32.totalorder %v820, 16
        %v822 = vsel %vm821, 1, 0
        %vm823 = vcmp.eq.s32.totalorder %v822, 1
        %v824 = vsel %vm823, %v778, -1e+30
        %v825 = vsel %vm823, %v781, -1e+30
        %v826 = vsel %vm823, %v786, -1e+30
        %v827 = vsel %vm823, %v789, -1e+30
        %v828 = vsel %vm823, %v794, -1e+30
        %v829 = vsel %vm823, %v797, -1e+30
        %v830 = vsel %vm823, %v802, -1e+30
        %v831 = vsel %vm823, %v805, -1e+30
        %v832 = vsel %vm823, %v353, 0.0
        %v833 = vsel %vm823, %v354, 0.0
        %v834 = vsel %vm823, %v355, 0.0
        %v835 = vsel %vm823, %v356, 0.0
        %v836 = vsel %vm823, %v357, 0.0
        %v837 = vsel %vm823, %v358, 0.0
        %v838 = vsel %vm823, %v359, 0.0
        %v839 = vsel %vm823, %v360, 0.0
        %v840 = vmax.f32 %v810, %v824
        %v841 = vmax.f32 %v811, %v825
        %v842 = vmax.f32 %v812, %v826
        %v843 = vmax.f32 %v813, %v827
        %v844 = vmax.f32 %v814, %v828
        %v845 = vmax.f32 %v815, %v829
        %v846 = vmax.f32 %v816, %v830
        %v847 = vmax.f32 %v817, %v831
        %v848 = vsub.f32 %v810, %v840
        %v849 = vsub.f32 %v811, %v841
        %v850 = vsub.f32 %v812, %v842
        %v851 = vsub.f32 %v813, %v843
        %v852 = vsub.f32 %v814, %v844
        %v853 = vsub.f32 %v815, %v845
        %v854 = vsub.f32 %v816, %v846
        %v855 = vsub.f32 %v817, %v847
        %v856 = vmul.f32 %v848, 1.442695
        %v857 = vpow.pop %v856
        %v858 = vmul.f32 %v849, 1.442695
        %v859 = vpow.pop %v858
        %v860 = vmul.f32 %v850, 1.442695
        %v861 = vpow.pop %v860
        %v862 = vmul.f32 %v851, 1.442695
        %v863 = vpow.pop %v862
        %v864 = vmul.f32 %v852, 1.442695
        %v865 = vpow.pop %v864
        %v866 = vmul.f32 %v853, 1.442695
        %v867 = vpow.pop %v866
        %v868 = vmul.f32 %v854, 1.442695
        %v869 = vpow.pop %v868
        %v870 = vmul.f32 %v855, 1.442695
        %v871 = vpow.pop %v870
        %v872 = vld [vmem:[#allocation3] sm:$0xff]
        %v873 = vld [vmem:[#allocation3 + $0x8] sm:$0xff]
        %v874 = vld [vmem:[#allocation3 + $0x10] sm:$0xff]
        %v875 = vld [vmem:[#allocation3 + $0x18] sm:$0xff]
        %v876 = vld [vmem:[#allocation3 + $0x20] sm:$0xff]
        %v877 = vld [vmem:[#allocation3 + $0x28] sm:$0xff]
        %v878 = vld [vmem:[#allocation3 + $0x30] sm:$0xff]
        %v879 = vld [vmem:[#allocation3 + $0x38] sm:$0xff]
        %v880 = vmul.f32 %v857, %v872
        %v881 = vmul.f32 %v859, %v873
        %v882 = vmul.f32 %v861, %v874
        %v883 = vmul.f32 %v863, %v875
        %v884 = vmul.f32 %v865, %v876
        %v885 = vmul.f32 %v867, %v877
        %v886 = vmul.f32 %v869, %v878
        %v887 = vmul.f32 %v871, %v879
        %v888 = vld [vmem:[#allocation4] sm:$0xff]
        %v889 = vld [vmem:[#allocation4 + $0x8] sm:$0xff]
        %v890 = vld [vmem:[#allocation4 + $0x10] sm:$0xff]
        %v891 = vld [vmem:[#allocation4 + $0x18] sm:$0xff]
        %v892 = vld [vmem:[#allocation4 + $0x20] sm:$0xff]
        %v893 = vld [vmem:[#allocation4 + $0x28] sm:$0xff]
        %v894 = vld [vmem:[#allocation4 + $0x30] sm:$0xff]
        %v895 = vld [vmem:[#allocation4 + $0x38] sm:$0xff]
        %v896 = vmul.f32 %v857, %v888
        %v897 = vmul.f32 %v859, %v889
        %v898 = vmul.f32 %v861, %v890
        %v899 = vmul.f32 %v863, %v891
        %v900 = vmul.f32 %v865, %v892
        %v901 = vmul.f32 %v867, %v893
        %v902 = vmul.f32 %v869, %v894
        %v903 = vmul.f32 %v871, %v895
        %v904 = vld [vmem:[#allocation5] sm:$0xff]
        %v905 = vld [vmem:[#allocation5 + $0x8] sm:$0xff]
        %v906 = vld [vmem:[#allocation5 + $0x10] sm:$0xff]
        %v907 = vld [vmem:[#allocation5 + $0x18] sm:$0xff]
        %v908 = vld [vmem:[#allocation5 + $0x20] sm:$0xff]
        %v909 = vld [vmem:[#allocation5 + $0x28] sm:$0xff]
        %v910 = vld [vmem:[#allocation5 + $0x30] sm:$0xff]
        %v911 = vld [vmem:[#allocation5 + $0x38] sm:$0xff]
        %v912 = vmul.f32 %v857, %v904
        %v913 = vmul.f32 %v859, %v905
        %v914 = vmul.f32 %v861, %v906
        %v915 = vmul.f32 %v863, %v907
        %v916 = vmul.f32 %v865, %v908
        %v917 = vmul.f32 %v867, %v909
        %v918 = vmul.f32 %v869, %v910
        %v919 = vmul.f32 %v871, %v911
        %v920 = vsub.f32 %v824, %v840
        %v921 = vsub.f32 %v825, %v841
        %v922 = vsub.f32 %v826, %v842
        %v923 = vsub.f32 %v827, %v843
        %v924 = vsub.f32 %v828, %v844
        %v925 = vsub.f32 %v829, %v845
        %v926 = vsub.f32 %v830, %v846
        %v927 = vsub.f32 %v831, %v847
        %v928 = vmul.f32 %v920, 1.442695
        %v929 = vpow.pop %v928
        %v930 = vmul.f32 %v921, 1.442695
        %v931 = vpow.pop %v930
        %v932 = vmul.f32 %v922, 1.442695
        %v933 = vpow.pop %v932
        %v934 = vmul.f32 %v923, 1.442695
        %v935 = vpow.pop %v934
        %v936 = vmul.f32 %v924, 1.442695
        %v937 = vpow.pop %v936
        %v938 = vmul.f32 %v925, 1.442695
        %v939 = vpow.pop %v938
        %v940 = vmul.f32 %v926, 1.442695
        %v941 = vpow.pop %v940
        %v942 = vmul.f32 %v927, 1.442695
        %v943 = vpow.pop %v942
        %v944 = vmul.f32 %v929, %v832
        %v945 = vmul.f32 %v931, %v833
        %v946 = vmul.f32 %v933, %v834
        %v947 = vmul.f32 %v935, %v835
        %v948 = vmul.f32 %v937, %v836
        %v949 = vmul.f32 %v939, %v837
        %v950 = vmul.f32 %v941, %v838
        %v951 = vmul.f32 %v943, %v839
        %v952 = vadd.f32 %v880, %v929
        %v953 = vadd.f32 %v881, %v931
        %v954 = vadd.f32 %v882, %v933
        %v955 = vadd.f32 %v883, %v935
        %v956 = vadd.f32 %v884, %v937
        %v957 = vadd.f32 %v885, %v939
        %v958 = vadd.f32 %v886, %v941
        %v959 = vadd.f32 %v887, %v943
        %v960 = vadd.f32 %v896, %v944
        %v961 = vadd.f32 %v897, %v945
        %v962 = vadd.f32 %v898, %v946
        %v963 = vadd.f32 %v899, %v947
        %v964 = vadd.f32 %v900, %v948
        %v965 = vadd.f32 %v901, %v949
        %v966 = vadd.f32 %v902, %v950
        %v967 = vadd.f32 %v903, %v951
        %v968 = vmul.f32 %v944, %v832
        %v969 = vmul.f32 %v945, %v833
        %v970 = vmul.f32 %v946, %v834
        %v971 = vmul.f32 %v947, %v835
        %v972 = vmul.f32 %v948, %v836
        %v973 = vmul.f32 %v949, %v837
        %v974 = vmul.f32 %v950, %v838
        %v975 = vmul.f32 %v951, %v839
        %v976 = vadd.f32 %v912, %v968
        %v977 = vadd.f32 %v913, %v969
        %v978 = vadd.f32 %v914, %v970
        %v979 = vadd.f32 %v915, %v971
        %v980 = vadd.f32 %v916, %v972
        %v981 = vadd.f32 %v917, %v973
        %v982 = vadd.f32 %v918, %v974
        %v983 = vadd.f32 %v919, %v975
        %984 = vst [vmem:[#allocation2] sm:$0xff] %v840
        %985 = vst [vmem:[#allocation2 + $0x8] sm:$0xff] %v841
        %986 = vst [vmem:[#allocation2 + $0x10] sm:$0xff] %v842
        %987 = vst [vmem:[#allocation2 + $0x18] sm:$0xff] %v843
        %988 = vst [vmem:[#allocation2 + $0x20] sm:$0xff] %v844
        %989 = vst [vmem:[#allocation2 + $0x28] sm:$0xff] %v845
        %990 = vst [vmem:[#allocation2 + $0x30] sm:$0xff] %v846
        %991 = vst [vmem:[#allocation2 + $0x38] sm:$0xff] %v847
        %992 = vst [vmem:[#allocation3] sm:$0xff] %v952
        %993 = vst [vmem:[#allocation3 + $0x8] sm:$0xff] %v953
        %994 = vst [vmem:[#allocation3 + $0x10] sm:$0xff] %v954
        %995 = vst [vmem:[#allocation3 + $0x18] sm:$0xff] %v955
        %996 = vst [vmem:[#allocation3 + $0x20] sm:$0xff] %v956
        %997 = vst [vmem:[#allocation3 + $0x28] sm:$0xff] %v957
        %998 = vst [vmem:[#allocation3 + $0x30] sm:$0xff] %v958
        %999 = vst [vmem:[#allocation3 + $0x38] sm:$0xff] %v959
        %1000 = vst [vmem:[#allocation4] sm:$0xff] %v960
        %1001 = vst [vmem:[#allocation4 + $0x8] sm:$0xff] %v961
        %1002 = vst [vmem:[#allocation4 + $0x10] sm:$0xff] %v962
        %1003 = vst [vmem:[#allocation4 + $0x18] sm:$0xff] %v963
        %1004 = vst [vmem:[#allocation4 + $0x20] sm:$0xff] %v964
        %1005 = vst [vmem:[#allocation4 + $0x28] sm:$0xff] %v965
        %1006 = vst [vmem:[#allocation4 + $0x30] sm:$0xff] %v966
        %1007 = vst [vmem:[#allocation4 + $0x38] sm:$0xff] %v967
        %1008 = vst [vmem:[#allocation5] sm:$0xff] %v976
        %1009 = vst [vmem:[#allocation5 + $0x8] sm:$0xff] %v977
        %1010 = vst [vmem:[#allocation5 + $0x10] sm:$0xff] %v978
        %1011 = vst [vmem:[#allocation5 + $0x18] sm:$0xff] %v979
        %1012 = vst [vmem:[#allocation5 + $0x20] sm:$0xff] %v980
        %1013 = vst [vmem:[#allocation5 + $0x28] sm:$0xff] %v981
        %1014 = vst [vmem:[#allocation5 + $0x30] sm:$0xff] %v982
        %1015 = vst [vmem:[#allocation5 + $0x38] sm:$0xff] %v983
        // Predicated region
        $region65: #{astp_forward.1} parent=39 // pred_check
          %p1016 = pneg %p317
        $region66: #{astp_forward.1} parent=39 // pred_check_branch
          %1018 = sbr.rel (%p1016) target = $region68
        $region67: #{astp_forward.1} parent=39 // pred_region
          %v1019 = vld [vmem:[#allocation2] sm:$0xff]
          %v1020 = vld [vmem:[#allocation2 + $0x8] sm:$0xff]
          %v1021 = vld [vmem:[#allocation2 + $0x10] sm:$0xff]
          %v1022 = vld [vmem:[#allocation2 + $0x18] sm:$0xff]
          %v1023 = vld [vmem:[#allocation2 + $0x20] sm:$0xff]
          %v1024 = vld [vmem:[#allocation2 + $0x28] sm:$0xff]
          %v1025 = vld [vmem:[#allocation2 + $0x30] sm:$0xff]
          %v1026 = vld [vmem:[#allocation2 + $0x38] sm:$0xff]
          %1027 = vmax.xlane.f32.xlu0 %v1019
          %v1028 = vpop.xlane.xlu0 %1027
          %1029 = vmax.xlane.f32.xlu0 %v1020
          %v1030 = vpop.xlane.xlu0 %1029
          %1031 = vmax.xlane.f32.xlu0 %v1021
          %v1032 = vpop.xlane.xlu0 %1031
          %1033 = vmax.xlane.f32.xlu0 %v1022
          %v1034 = vpop.xlane.xlu0 %1033
          %1035 = vmax.xlane.f32.xlu0 %v1023
          %v1036 = vpop.xlane.xlu0 %1035
          %1037 = vmax.xlane.f32.xlu0 %v1024
          %v1038 = vpop.xlane.xlu0 %1037
          %1039 = vmax.xlane.f32.xlu0 %v1025
          %v1040 = vpop.xlane.xlu0 %1039
          %1041 = vmax.xlane.f32.xlu0 %v1026
          %v1042 = vpop.xlane.xlu0 %1041
          %v1043 = vsub.f32 %v1019, %v1028
          %v1044 = vsub.f32 %v1020, %v1030
          %v1045 = vsub.f32 %v1021, %v1032
          %v1046 = vsub.f32 %v1022, %v1034
          %v1047 = vsub.f32 %v1023, %v1036
          %v1048 = vsub.f32 %v1024, %v1038
          %v1049 = vsub.f32 %v1025, %v1040
          %v1050 = vsub.f32 %v1026, %v1042
          %v1051 = vmul.f32 %v1043, 1.442695
          %v1052 = vpow.pop %v1051
          %v1053 = vmul.f32 %v1044, 1.442695
          %v1054 = vpow.pop %v1053
          %v1055 = vmul.f32 %v1045, 1.442695
          %v1056 = vpow.pop %v1055
          %v1057 = vmul.f32 %v1046, 1.442695
          %v1058 = vpow.pop %v1057
          %v1059 = vmul.f32 %v1047, 1.442695
          %v1060 = vpow.pop %v1059
          %v1061 = vmul.f32 %v1048, 1.442695
          %v1062 = vpow.pop %v1061
          %v1063 = vmul.f32 %v1049, 1.442695
          %v1064 = vpow.pop %v1063
          %v1065 = vmul.f32 %v1050, 1.442695
          %v1066 = vpow.pop %v1065
          %v1067 = vld [vmem:[#allocation3] sm:$0xff]
          %v1068 = vld [vmem:[#allocation3 + $0x8] sm:$0xff]
          %v1069 = vld [vmem:[#allocation3 + $0x10] sm:$0xff]
          %v1070 = vld [vmem:[#allocation3 + $0x18] sm:$0xff]
          %v1071 = vld [vmem:[#allocation3 + $0x20] sm:$0xff]
          %v1072 = vld [vmem:[#allocation3 + $0x28] sm:$0xff]
          %v1073 = vld [vmem:[#allocation3 + $0x30] sm:$0xff]
          %v1074 = vld [vmem:[#allocation3 + $0x38] sm:$0xff]
          %v1075 = vmul.f32 %v1067, %v1052
          %v1076 = vmul.f32 %v1068, %v1054
          %v1077 = vmul.f32 %v1069, %v1056
          %v1078 = vmul.f32 %v1070, %v1058
          %v1079 = vmul.f32 %v1071, %v1060
          %v1080 = vmul.f32 %v1072, %v1062
          %v1081 = vmul.f32 %v1073, %v1064
          %v1082 = vmul.f32 %v1074, %v1066
          %1083 = vadd.xlane.f32.xlu0 %v1075
          %v1084 = vpop.xlane.xlu0 %1083
          %1085 = vadd.xlane.f32.xlu0 %v1076
          %v1086 = vpop.xlane.xlu0 %1085
          %1087 = vadd.xlane.f32.xlu0 %v1077
          %v1088 = vpop.xlane.xlu0 %1087
          %1089 = vadd.xlane.f32.xlu0 %v1078
          %v1090 = vpop.xlane.xlu0 %1089
          %1091 = vadd.xlane.f32.xlu0 %v1079
          %v1092 = vpop.xlane.xlu0 %1091
          %1093 = vadd.xlane.f32.xlu0 %v1080
          %v1094 = vpop.xlane.xlu0 %1093
          %1095 = vadd.xlane.f32.xlu0 %v1081
          %v1096 = vpop.xlane.xlu0 %1095
          %1097 = vadd.xlane.f32.xlu0 %v1082
          %v1098 = vpop.xlane.xlu0 %1097
          %v1099 = vld [vmem:[#allocation4] sm:$0xff]
          %v1100 = vld [vmem:[#allocation4 + $0x8] sm:$0xff]
          %v1101 = vld [vmem:[#allocation4 + $0x10] sm:$0xff]
          %v1102 = vld [vmem:[#allocation4 + $0x18] sm:$0xff]
          %v1103 = vld [vmem:[#allocation4 + $0x20] sm:$0xff]
          %v1104 = vld [vmem:[#allocation4 + $0x28] sm:$0xff]
          %v1105 = vld [vmem:[#allocation4 + $0x30] sm:$0xff]
          %v1106 = vld [vmem:[#allocation4 + $0x38] sm:$0xff]
          %v1107 = vmul.f32 %v1099, %v1052
          %v1108 = vmul.f32 %v1100, %v1054
          %v1109 = vmul.f32 %v1101, %v1056
          %v1110 = vmul.f32 %v1102, %v1058
          %v1111 = vmul.f32 %v1103, %v1060
          %v1112 = vmul.f32 %v1104, %v1062
          %v1113 = vmul.f32 %v1105, %v1064
          %v1114 = vmul.f32 %v1106, %v1066
          %1115 = vadd.xlane.f32.xlu0 %v1107
          %v1116 = vpop.xlane.xlu0 %1115
          %1117 = vadd.xlane.f32.xlu0 %v1108
          %v1118 = vpop.xlane.xlu0 %1117
          %1119 = vadd.xlane.f32.xlu0 %v1109
          %v1120 = vpop.xlane.xlu0 %1119
          %1121 = vadd.xlane.f32.xlu0 %v1110
          %v1122 = vpop.xlane.xlu0 %1121
          %1123 = vadd.xlane.f32.xlu0 %v1111
          %v1124 = vpop.xlane.xlu0 %1123
          %1125 = vadd.xlane.f32.xlu0 %v1112
          %v1126 = vpop.xlane.xlu0 %1125
          %1127 = vadd.xlane.f32.xlu0 %v1113
          %v1128 = vpop.xlane.xlu0 %1127
          %1129 = vadd.xlane.f32.xlu0 %v1114
          %v1130 = vpop.xlane.xlu0 %1129
          %v1131 = vld [vmem:[#allocation5] sm:$0xff]
          %v1132 = vld [vmem:[#allocation5 + $0x8] sm:$0xff]
          %v1133 = vld [vmem:[#allocation5 + $0x10] sm:$0xff]
          %v1134 = vld [vmem:[#allocation5 + $0x18] sm:$0xff]
          %v1135 = vld [vmem:[#allocation5 + $0x20] sm:$0xff]
          %v1136 = vld [vmem:[#allocation5 + $0x28] sm:$0xff]
          %v1137 = vld [vmem:[#allocation5 + $0x30] sm:$0xff]
          %v1138 = vld [vmem:[#allocation5 + $0x38] sm:$0xff]
          %v1139 = vmul.f32 %v1131, %v1052
          %v1140 = vmul.f32 %v1132, %v1054
          %v1141 = vmul.f32 %v1133, %v1056
          %v1142 = vmul.f32 %v1134, %v1058
          %v1143 = vmul.f32 %v1135, %v1060
          %v1144 = vmul.f32 %v1136, %v1062
          %v1145 = vmul.f32 %v1137, %v1064
          %v1146 = vmul.f32 %v1138, %v1066
          %1147 = vadd.xlane.f32.xlu0 %v1139
          %v1148 = vpop.xlane.xlu0 %1147
          %1149 = vadd.xlane.f32.xlu0 %v1140
          %v1150 = vpop.xlane.xlu0 %1149
          %1151 = vadd.xlane.f32.xlu0 %v1141
          %v1152 = vpop.xlane.xlu0 %1151
          %1153 = vadd.xlane.f32.xlu0 %v1142
          %v1154 = vpop.xlane.xlu0 %1153
          %1155 = vadd.xlane.f32.xlu0 %v1143
          %v1156 = vpop.xlane.xlu0 %1155
          %1157 = vadd.xlane.f32.xlu0 %v1144
          %v1158 = vpop.xlane.xlu0 %1157
          %1159 = vadd.xlane.f32.xlu0 %v1145
          %v1160 = vpop.xlane.xlu0 %1159
          %1161 = vadd.xlane.f32.xlu0 %v1146
          %v1162 = vpop.xlane.xlu0 %1161
          %v1163 = vrcp.pop %v1084
          %v1164 = vrcp.pop %v1086
          %v1165 = vrcp.pop %v1088
          %v1166 = vrcp.pop %v1090
          %v1167 = vrcp.pop %v1092
          %v1168 = vrcp.pop %v1094
          %v1169 = vrcp.pop %v1096
          %v1170 = vrcp.pop %v1098
          %v1171 = vmul.f32 %v1116, %v1163
          %v1172 = vmul.f32 %v1118, %v1164
          %v1173 = vmul.f32 %v1120, %v1165
          %v1174 = vmul.f32 %v1122, %v1166
          %v1175 = vmul.f32 %v1124, %v1167
          %v1176 = vmul.f32 %v1126, %v1168
          %v1177 = vmul.f32 %v1128, %v1169
          %v1178 = vmul.f32 %v1130, %v1170
          %v1179 = vmul.f32 %v1148, %v1163
          %v1180 = vmul.f32 %v1150, %v1164
          %v1181 = vmul.f32 %v1152, %v1165
          %v1182 = vmul.f32 %v1154, %v1166
          %v1183 = vmul.f32 %v1156, %v1167
          %v1184 = vmul.f32 %v1158, %v1168
          %v1185 = vmul.f32 %v1160, %v1169
          %v1186 = vmul.f32 %v1162, %v1170
          %v1187 = vmul.f32 %v1171, %v1171
          %v1188 = vmul.f32 %v1172, %v1172
          %v1189 = vmul.f32 %v1173, %v1173
          %v1190 = vmul.f32 %v1174, %v1174
          %v1191 = vmul.f32 %v1175, %v1175
          %v1192 = vmul.f32 %v1176, %v1176
          %v1193 = vmul.f32 %v1177, %v1177
          %v1194 = vmul.f32 %v1178, %v1178
          %v1195 = vsub.f32 %v1179, %v1187
          %v1196 = vsub.f32 %v1180, %v1188
          %v1197 = vsub.f32 %v1181, %v1189
          %v1198 = vsub.f32 %v1182, %v1190
          %v1199 = vsub.f32 %v1183, %v1191
          %v1200 = vsub.f32 %v1184, %v1192
          %v1201 = vsub.f32 %v1185, %v1193
          %v1202 = vsub.f32 %v1186, %v1194
          %v1203 = vmax.f32 %v1195, 1e-07
          %v1204 = vmax.f32 %v1196, 1e-07
          %v1205 = vmax.f32 %v1197, 1e-07
          %v1206 = vmax.f32 %v1198, 1e-07
          %v1207 = vmax.f32 %v1199, 1e-07
          %v1208 = vmax.f32 %v1200, 1e-07
          %v1209 = vmax.f32 %v1201, 1e-07
          %v1210 = vmax.f32 %v1202, 1e-07
          %v1211 = vrsqrt.pop %v1203
          %v1212 = vmul.f32 %v1203, %v1211
          %vm1213 = vcmp.eq.f32.partialorder %v1203, inf
          %v1214 = vsel %vm1213, %v1203, %v1212
          %vm1215 = vcmp.eq.f32.partialorder %v1203, 0.0
          %v1216 = vand.u32 %v1203, 2147483648
          %v1217 = vsel %vm1215, %v1216, %v1214
          %v1218 = vrsqrt.pop %v1204
          %v1219 = vmul.f32 %v1204, %v1218
          %vm1220 = vcmp.eq.f32.partialorder %v1204, inf
          %v1221 = vsel %vm1220, %v1204, %v1219
          %vm1222 = vcmp.eq.f32.partialorder %v1204, 0.0
          %v1223 = vand.u32 %v1204, 2147483648
          %v1224 = vsel %vm1222, %v1223, %v1221
          %v1225 = vrsqrt.pop %v1205
          %v1226 = vmul.f32 %v1205, %v1225
          %vm1227 = vcmp.eq.f32.partialorder %v1205, inf
          %v1228 = vsel %vm1227, %v1205, %v1226
          %vm1229 = vcmp.eq.f32.partialorder %v1205, 0.0
          %v1230 = vand.u32 %v1205, 2147483648
          %v1231 = vsel %vm1229, %v1230, %v1228
          %v1232 = vrsqrt.pop %v1206
          %v1233 = vmul.f32 %v1206, %v1232
          %vm1234 = vcmp.eq.f32.partialorder %v1206, inf
          %v1235 = vsel %vm1234, %v1206, %v1233
          %vm1236 = vcmp.eq.f32.partialorder %v1206, 0.0
          %v1237 = vand.u32 %v1206, 2147483648
          %v1238 = vsel %vm1236, %v1237, %v1235
          %v1239 = vrsqrt.pop %v1207
          %v1240 = vmul.f32 %v1207, %v1239
          %vm1241 = vcmp.eq.f32.partialorder %v1207, inf
          %v1242 = vsel %vm1241, %v1207, %v1240
          %vm1243 = vcmp.eq.f32.partialorder %v1207, 0.0
          %v1244 = vand.u32 %v1207, 2147483648
          %v1245 = vsel %vm1243, %v1244, %v1242
          %v1246 = vrsqrt.pop %v1208
          %v1247 = vmul.f32 %v1208, %v1246
          %vm1248 = vcmp.eq.f32.partialorder %v1208, inf
          %v1249 = vsel %vm1248, %v1208, %v1247
          %vm1250 = vcmp.eq.f32.partialorder %v1208, 0.0
          %v1251 = vand.u32 %v1208, 2147483648
          %v1252 = vsel %vm1250, %v1251, %v1249
          %v1253 = vrsqrt.pop %v1209
          %v1254 = vmul.f32 %v1209, %v1253
          %vm1255 = vcmp.eq.f32.partialorder %v1209, inf
          %v1256 = vsel %vm1255, %v1209, %v1254
          %vm1257 = vcmp.eq.f32.partialorder %v1209, 0.0
          %v1258 = vand.u32 %v1209, 2147483648
          %v1259 = vsel %vm1257, %v1258, %v1256
          %v1260 = vrsqrt.pop %v1210
          %v1261 = vmul.f32 %v1210, %v1260
          %vm1262 = vcmp.eq.f32.partialorder %v1210, inf
          %v1263 = vsel %vm1262, %v1210, %v1261
          %vm1264 = vcmp.eq.f32.partialorder %v1210, 0.0
          %v1265 = vand.u32 %v1210, 2147483648
          %v1266 = vsel %vm1264, %v1265, %v1263
          %vm1267 = vcmask 7168
          %1268 = vst.msk [vmem:[%s315] sm:$0xff] %vm1267, %v1171
          %1269 = vst.msk [vmem:[%s315 + $0x8] sm:$0xff] %vm1267, %v1172
          %1270 = vst.msk [vmem:[%s315 + $0x10] sm:$0xff] %vm1267, %v1173
          %1271 = vst.msk [vmem:[%s315 + $0x18] sm:$0xff] %vm1267, %v1174
          %1272 = vst.msk [vmem:[%s315 + $0x20] sm:$0xff] %vm1267, %v1175
          %1273 = vst.msk [vmem:[%s315 + $0x28] sm:$0xff] %vm1267, %v1176
          %1274 = vst.msk [vmem:[%s315 + $0x30] sm:$0xff] %vm1267, %v1177
          %1275 = vst.msk [vmem:[%s315 + $0x38] sm:$0xff] %vm1267, %v1178
          %1276 = vst.msk [vmem:[%s315 + $0x40] sm:$0xff] %vm1267, %v1217
          %1277 = vst.msk [vmem:[%s315 + $0x48] sm:$0xff] %vm1267, %v1224
          %1278 = vst.msk [vmem:[%s315 + $0x50] sm:$0xff] %vm1267, %v1231
          %1279 = vst.msk [vmem:[%s315 + $0x58] sm:$0xff] %vm1267, %v1238
          %1280 = vst.msk [vmem:[%s315 + $0x60] sm:$0xff] %vm1267, %v1245
          %1281 = vst.msk [vmem:[%s315 + $0x68] sm:$0xff] %vm1267, %v1252
          %1282 = vst.msk [vmem:[%s315 + $0x70] sm:$0xff] %vm1267, %v1259
          %1283 = vst.msk [vmem:[%s315 + $0x78] sm:$0xff] %vm1267, %v1266
        $region68: #{astp_forward.1} parent=39 // pred_fallthru
          _
        %s1284 = sand.u32 %s156, 1
        %s1285 = scalar_lea.sflag [#allocation8], %s1284
        %s1286 = sand.u32 %s156, 1
        %s1287 = smul.addr %s1286, 128
        %s1288 = scalar_lea.vmem [#allocation15], %s1287
        // Predicated region
        $region69: #{astp_forward.1} parent=39 // pred_check
          %p1289 = pneg %p166
        $region70: #{astp_forward.1} parent=39 // pred_check_branch
          %1291 = sbr.rel (%p1289) target = $region72
        $region71: #{astp_forward.1} parent=39 // pred_region
          %s1293 = ssub.s32 2048, 2048
          %1294 = vsyncadd %s1285, %s1293
          %s1295 = smul.addr %s28, 16
          %s1296 = smul.addr %s1295, 128
          %s1297 = scalar_lea.hbm %s5, %s1296
          %s1298 = sshll.u32 %s1288, 4
          %s1299 = int_to_ptr.vmem [resolvable:$true] %s1298
          %1304 = dma.vmem_to_hbm [thread:$0]  %s1299, 2048, %s1297, %s1285, 128, 128, 8
        $region72: #{astp_forward.1} parent=39 // pred_fallthru
          _
      $region40: #{astp_forward.1} parent=5 // pred_fallthru
        _
      %p1305 = scmp.le.s32.totalorder 2, %s19
      // Predicated region
      $region73: #{astp_forward.1} parent=5 // pred_check
        %p1306 = pneg %p1305
      $region74: #{astp_forward.1} parent=5 // pred_check_branch
        %1308 = sbr.rel (%p1306) target = $region76
      $region75: #{astp_forward.1} parent=5 // pred_region
        %s1309 = ssub.s32 %s19, 2
        // Predicated region
        $region77: #{astp_forward.1} parent=75 // pred_check
          %p1310 = pneg %p172
        $region78: #{astp_forward.1} parent=75 // pred_check_branch
          %1312 = sbr.rel (%p1310) target = $region80
        $region79: #{astp_forward.1} parent=75 // pred_region
          %s1313 = sand.u32 %s157, 1
          %s1314 = scalar_lea.sflag [#allocation8], %s1313
          %s1315 = sand.u32 %s157, 1
          %s1316 = smul.addr %s1315, 128
          %s1317 = scalar_lea.vmem [#allocation15], %s1316
          %1318 = dma.done %s1314, 2048
        $region80: #{astp_forward.1} parent=75 // pred_fallthru
          _
      $region76: #{astp_forward.1} parent=5 // pred_fallthru
        _
    $region6: #{astp_forward.1} parent=1 // loop_footer
      %s23 = sadd.s32 1, %s19
    $region7: #{astp_forward.1} parent=1 // loop_footer_branch
      %18 = sbr.rel target = $region3
    $region8: #{astp_forward.1} parent=1 // loop_exit
      _
    %1319 = vsyncpa [#allocation7], 1
    %s1320 = scalar_lea.sflag [#allocation7], 1
    %1321 = vsyncpa %s1320, 1
    %1322 = vsyncpa [#allocation10], 1
    %1323 = vsyncpa [#allocation13], 1
    %1324 = vsyncpa [#allocation8], 1
    %s1325 = scalar_lea.sflag [#allocation8], 1
    %1326 = vsyncpa %s1325, 1

</llo_original>
